<compile_context>
chip_gen: v6e
topology: v6e:2x2x1
jax: 0.10.0
libtpu: 0.0.40
codegen_flags: <defaults>
</compile_context>

<pallas_src>
import jax
import jax.numpy as jnp
import numpy as np
from jax import lax
from jax.experimental import pallas as pl
from jax.experimental.pallas import tpu as pltpu

EPS = 1e-5


# ----------------------------- fused Pallas kernel --------------------------

def down_block_kernel(x_ref, wd_ref, aff0_ref, w1_ref, aff1_ref, w2t_ref, aff2t_ref,
                      o_ref, pad1_ref, pad2_ref):
    """Whole DownBlock for one batch element.

    x_ref   : (1, H2, 2, W2, 2*Cin)  NHWC input viewed as 2x2 patches
    wd_ref  : (4*Cin, Cin)           2x2/s2 conv weights, (kh, kw, c) row order
    aff0    : (2, Cin)               folded BN (scale; shift)
    w1_ref  : (9*Cin, Cout)          3x3 conv1 weights, (dy, dx, c) row order
    aff1    : (2, Cout)
    w2t_ref : (Cout, 9*Cout)         3x3 conv2 weights, transposed
    aff2t   : (Cout, 2)
    o_ref   : (1, Cout, H2*W2)       NCHW-flattened output (lane-dense store)
    pad1/2  : zero-halo VMEM scratch (H2+2, W2+2, Cin/Cout)
    """
    H2 = pad1_ref.shape[0] - 2
    W2 = pad1_ref.shape[1] - 2
    cin = pad1_ref.shape[2]
    cout = pad2_ref.shape[2]

    # ---- stage 0: 2x2 stride-2 conv (space-to-depth + one matmul) + BN + ReLU
    x = x_ref[0]                                   # (H2, 2, W2, 2*Cin)
    top = x[:, 0, :, :]                            # rows 2i   -> (H2, W2, 2*Cin)
    bot = x[:, 1, :, :]                            # rows 2i+1
    p0 = jnp.concatenate([top, bot], axis=-1)      # (H2, W2, 4*Cin), (kh,kw,c)
    a0 = aff0_ref[...]
    y0 = lax.dot_general(p0, wd_ref[...], (((2,), (0,)), ((), ())),
                         preferred_element_type=jnp.float32)      # (H2, W2, Cin)
    y0 = jnp.maximum(y0 * a0[0:1, :] + a0[1:2, :], 0.0)

    # ---- stage 1: 3x3 / pad=1 conv via im2col (single K=9*Cin matmul) + BN + ReLU
    pad1_ref[...] = jnp.zeros_like(pad1_ref)
    pad1_ref[pl.ds(1, H2), pl.ds(1, W2), :] = y0
    xp1 = pad1_ref[...]
    p1 = jnp.concatenate(
        [xp1[dy:dy + H2, dx:dx + W2, :] for dy in range(3) for dx in range(3)],
        axis=-1)                                                  # (H2, W2, 9*Cin)
    a1 = aff1_ref[...]
    y1 = lax.dot_general(p1, w1_ref[...], (((2,), (0,)), ((), ())),
                         preferred_element_type=jnp.float32)      # (H2, W2, Cout)
    y1 = jnp.maximum(y1 * a1[0:1, :] + a1[1:2, :], 0.0)

    # ---- stage 2: second 3x3 conv, emitted transposed -> lane-dense NCHW store
    pad2_ref[...] = jnp.zeros_like(pad2_ref)
    pad2_ref[pl.ds(1, H2), pl.ds(1, W2), :] = y1
    xp2 = pad2_ref[...]
    p2 = jnp.concatenate(
        [xp2[dy:dy + H2, dx:dx + W2, :] for dy in range(3) for dx in range(3)],
        axis=-1).reshape(H2 * W2, 9 * cout)                       # (M, 9*Cout)
    a2 = aff2t_ref[...]                                           # (Cout, 2)
    y2t = lax.dot_general(w2t_ref[...], p2, (((1,), (1,)), ((), ())),
                          preferred_element_type=jnp.float32)     # (Cout, M)
    y2t = jnp.maximum(y2t * a2[:, 0:1] + a2[:, 1:2], 0.0)
    o_ref[0] = y2t.astype(o_ref.dtype)


# ----------------------------- wrapper --------------------------------------

def bn_fold(gamma, beta, mean, var):
    """Fold eval-mode BatchNorm into per-channel (scale; shift), packed (2, C)."""
    scale = gamma / jnp.sqrt(var + EPS)
    shift = beta - mean * scale
    return jnp.stack([scale, shift], axis=0)


def down_block_forward(x_nchw, params):
    """DownBlock forward. Input/output NCHW (PyTorch convention)."""
    N, cin, H, W = x_nchw.shape
    cout = params["w1"].shape[-1]
    H2, W2 = H // 2, W // 2

    # NCHW -> NHWC once (the only layout copy), then a free reshape exposing the
    # 2x2 patch structure so the kernel does space-to-depth with plain indexing.
    x = jnp.transpose(x_nchw, (0, 2, 3, 1))
    x5 = x.reshape(N, H2, 2, W2, 2 * cin)

    wd = params["w_down"].reshape(4 * cin, cin)           # (kh,kw,c) x Cin
    w1 = params["w1"].reshape(9 * cin, cout)              # (dy,dx,c) x Cout
    w2t = params["w2"].reshape(9 * cout, cout).T          # (Cout, 9*Cout)
    aff0 = bn_fold(*params["bn_down"])                    # (2, Cin)
    aff1 = bn_fold(*params["bn1"])                        # (2, Cout)
    aff2t = bn_fold(*params["bn2"]).T                     # (Cout, 2)

    out = pl.pallas_call(
        down_block_kernel,
        out_shape=jax.ShapeDtypeStruct((N, cout, H2 * W2), jnp.float32),
        grid=(N,),
        in_specs=[
            pl.BlockSpec((1, H2, 2, W2, 2 * cin), lambda n: (n, 0, 0, 0, 0)),
            pl.BlockSpec((4 * cin, cin), lambda n: (0, 0)),
            pl.BlockSpec((2, cin), lambda n: (0, 0)),
            pl.BlockSpec((9 * cin, cout), lambda n: (0, 0)),
            pl.BlockSpec((2, cout), lambda n: (0, 0)),
            pl.BlockSpec((cout, 9 * cout), lambda n: (0, 0)),
            pl.BlockSpec((cout, 2), lambda n: (0, 0)),
        ],
        out_specs=pl.BlockSpec((1, cout, H2 * W2), lambda n: (n, 0, 0)),
        scratch_shapes=[
            pltpu.VMEM((H2 + 2, W2 + 2, cin), jnp.float32),
            pltpu.VMEM((H2 + 2, W2 + 2, cout), jnp.float32),
        ],
        compiler_params=pltpu.CompilerParams(
            dimension_semantics=("parallel",),
        ),
    )(x5, wd, aff0, w1, aff1, w2t, aff2t)

    # (N, Cout, H2*W2) is already NCHW order -> free reshape, no transpose.
    return out.reshape(N, cout, H2, W2)


# ----------------------------- params / reference ---------------------------

def init_params(key, c_in, c_out):
    ks = jax.random.split(key, 6)

    def bn(k, c):
        k1, k2, k3, k4 = jax.random.split(k, 4)
        gamma = jax.random.uniform(k1, (c,), minval=0.5, maxval=1.5)
        beta = jax.random.normal(k2, (c,)) * 0.1
        mean = jax.random.normal(k3, (c,)) * 0.1
        var = jax.random.uniform(k4, (c,), minval=0.5, maxval=1.5)
        return (gamma, beta, mean, var)

    return {
        "w_down": jax.random.normal(ks[0], (2, 2, c_in, c_in)) * 0.2,   # HWIO
        "bn_down": bn(ks[1], c_in),
        "w1": jax.random.normal(ks[2], (3, 3, c_in, c_out)) * 0.2,      # HWIO
        "bn1": bn(ks[3], c_out),
        "w2": jax.random.normal(ks[4], (3, 3, c_out, c_out)) * 0.2,     # HWIO
        "bn2": bn(ks[5], c_out),
    }


def reference_forward(x_nchw, params):
    """Pure-JAX reference (same eval-mode BN semantics)."""
    x = jnp.transpose(x_nchw, (0, 2, 3, 1))
    dn = ("NHWC", "HWIO", "NHWC")

    def bn_relu(y, bnp):
        gamma, beta, mean, var = bnp
        y = (y - mean) / jnp.sqrt(var + EPS) * gamma + beta
        return jnp.maximum(y, 0.0)

    y = lax.conv_general_dilated(x, params["w_down"], (2, 2), "VALID",
                                 dimension_numbers=dn)
    y = bn_relu(y, params["bn_down"])
    y = lax.conv_general_dilated(y, params["w1"], (1, 1), [(1, 1), (1, 1)],
                                 dimension_numbers=dn)
    y = bn_relu(y, params["bn1"])
    y = lax.conv_general_dilated(y, params["w2"], (1, 1), [(1, 1), (1, 1)],
                                 dimension_numbers=dn)
    y = bn_relu(y, params["bn2"])
    return jnp.transpose(y, (0, 3, 1, 2))


# ----------------------------- main ------------------------------------------

if __name__ == "__main__":
    key = jax.random.PRNGKey(0)
    k_x, k_p = jax.random.split(key)

    N, C_IN, H, W = 2, 4, 16, 16
    C_OUT = 8

    x = jax.random.normal(k_x, (N, C_IN, H, W), dtype=jnp.float32)  # NCHW
    params = init_params(k_p, C_IN, C_OUT)

    out = jax.block_until_ready(down_block_forward(x, params))
    ref = jax.block_until_ready(reference_forward(x, params))

    assert out.shape == (N, C_OUT, H // 2, W // 2), out.shape
    np.testing.assert_allclose(np.asarray(out), np.asarray(ref), rtol=1e-4, atol=1e-4)

    print("KERNEL_OK")
</pallas_src>

<mosaic_0001>
module attributes {stable_mosaic.version = 11 : i64} {
  func.func @down_block_kernel(%arg0: i32, %arg1: memref<1x8x2x8x8xf32, #tpu.memory_space<vmem>>, %arg2: memref<16x4xf32, #tpu.memory_space<vmem>>, %arg3: memref<2x4xf32, #tpu.memory_space<vmem>>, %arg4: memref<36x8xf32, #tpu.memory_space<vmem>>, %arg5: memref<2x8xf32, #tpu.memory_space<vmem>>, %arg6: memref<8x72xf32, #tpu.memory_space<vmem>>, %arg7: memref<8x2xf32, #tpu.memory_space<vmem>>, %arg8: memref<1x8x64xf32, #tpu.memory_space<vmem>>, %arg9: memref<10x10x4xf32, #tpu.memory_space<vmem>>, %arg10: memref<10x10x8xf32, #tpu.memory_space<vmem>>) attributes {dimension_semantics = [#tpu.dimension_semantics<parallel>], iteration_bounds = array<i64: 2>, scalar_prefetch = 0 : i64, scratch_operands = 2 : i64, tpu.core_type = #tpu.core_type<tc>, window_params = [{transform_indices = @transform_0, window_bounds = array<i64: 1, 8, 2, 8, 8>}, {pipeline_mode = #tpu.pipeline_mode<synchronous>, transform_indices = @transform_1, window_bounds = array<i64: 16, 4>}, {pipeline_mode = #tpu.pipeline_mode<synchronous>, transform_indices = @transform_2, window_bounds = array<i64: 2, 4>}, {pipeline_mode = #tpu.pipeline_mode<synchronous>, transform_indices = @transform_3, window_bounds = array<i64: 36, 8>}, {pipeline_mode = #tpu.pipeline_mode<synchronous>, transform_indices = @transform_4, window_bounds = array<i64: 2, 8>}, {pipeline_mode = #tpu.pipeline_mode<synchronous>, transform_indices = @transform_5, window_bounds = array<i64: 8, 72>}, {pipeline_mode = #tpu.pipeline_mode<synchronous>, transform_indices = @transform_6, window_bounds = array<i64: 8, 2>}, {transform_indices = @transform_7, window_bounds = array<i64: 1, 8, 64>}]} {
    %c0 = arith.constant 0 : index
    %c0_0 = arith.constant 0 : index
    %c0_1 = arith.constant 0 : index
    %c0_2 = arith.constant 0 : index
    %c0_3 = arith.constant 0 : index
    %0 = vector.load %arg1[%c0, %c0_0, %c0_1, %c0_2, %c0_3] : memref<1x8x2x8x8xf32, #tpu.memory_space<vmem>>, vector<1x8x2x8x8xf32>
    %1 = vector.shape_cast %0 : vector<1x8x2x8x8xf32> to vector<8x2x8x8xf32>
    %2 = vector.extract_strided_slice %1 {offsets = [0, 0, 0, 0], sizes = [8, 1, 8, 8], strides = [1, 1, 1, 1]} : vector<8x2x8x8xf32> to vector<8x1x8x8xf32>
    %3 = vector.shape_cast %2 : vector<8x1x8x8xf32> to vector<8x8x8xf32>
    %4 = vector.extract_strided_slice %1 {offsets = [0, 1, 0, 0], sizes = [8, 1, 8, 8], strides = [1, 1, 1, 1]} : vector<8x2x8x8xf32> to vector<8x1x8x8xf32>
    %5 = vector.shape_cast %4 : vector<8x1x8x8xf32> to vector<8x8x8xf32>
    %6 = tpu.concatenate %3, %5 in 2 : vector<8x8x8xf32>, vector<8x8x8xf32> -> vector<8x8x16xf32>
    %c0_4 = arith.constant 0 : index
    %c0_5 = arith.constant 0 : index
    %7 = vector.load %arg3[%c0_4, %c0_5] : memref<2x4xf32, #tpu.memory_space<vmem>>, vector<2x4xf32>
    %c0_6 = arith.constant 0 : index
    %c0_7 = arith.constant 0 : index
    %8 = vector.load %arg2[%c0_6, %c0_7] : memref<16x4xf32, #tpu.memory_space<vmem>>, vector<16x4xf32>
    %cst = arith.constant dense<0.000000e+00> : vector<8x8x4xf32>
    %9 = tpu.matmul %6, %8, %cst {dimension_numbers = #tpu.dot_dimension_numbers<[2], [0], [0, 1], [1], [0, 0, 0, 1, 1, 1], [], []>} : vector<8x8x16xf32>, vector<16x4xf32>, vector<8x8x4xf32> -> vector<8x8x4xf32>
    %10 = vector.extract_strided_slice %7 {offsets = [0, 0], sizes = [1, 4], strides = [1, 1]} : vector<2x4xf32> to vector<1x4xf32>
    %11 = vector.shape_cast %10 : vector<1x4xf32> to vector<1x1x4xf32>
    %12 = vector.broadcast %11 : vector<1x1x4xf32> to vector<8x8x4xf32>
    %13 = arith.mulf %9, %12 : vector<8x8x4xf32>
    %14 = vector.extract_strided_slice %7 {offsets = [1, 0], sizes = [1, 4], strides = [1, 1]} : vector<2x4xf32> to vector<1x4xf32>
    %15 = vector.shape_cast %14 : vector<1x4xf32> to vector<1x1x4xf32>
    %16 = vector.broadcast %15 : vector<1x1x4xf32> to vector<8x8x4xf32>
    %17 = arith.addf %13, %16 : vector<8x8x4xf32>
    %cst_8 = arith.constant 0.000000e+00 : f32
    %18 = vector.broadcast %cst_8 : f32 to vector<8x8x4xf32>
    %19 = arith.maximumf %17, %18 : vector<8x8x4xf32>
    %cst_9 = arith.constant 0.000000e+00 : f32
    %20 = vector.broadcast %cst_9 : f32 to vector<10x10x4xf32>
    %c0_10 = arith.constant 0 : index
    %c0_11 = arith.constant 0 : index
    %c0_12 = arith.constant 0 : index
    %21 = vector.load %arg9[%c0_10, %c0_11, %c0_12] : memref<10x10x4xf32, #tpu.memory_space<vmem>>, vector<10x10x4xf32>
    tpu.vector_store %arg9[%c0_10, %c0_11, %c0_12], %20 {strides = array<i32>} : memref<10x10x4xf32, #tpu.memory_space<vmem>>, vector<10x10x4xf32>,
    %c1 = arith.constant 1 : index
    %c1_13 = arith.constant 1 : index
    %c0_14 = arith.constant 0 : index
    %22 = vector.load %arg9[%c1, %c1_13, %c0_14] : memref<10x10x4xf32, #tpu.memory_space<vmem>>, vector<8x8x4xf32>
    tpu.vector_store %arg9[%c1, %c1_13, %c0_14], %19 {strides = array<i32>} : memref<10x10x4xf32, #tpu.memory_space<vmem>>, vector<8x8x4xf32>,
    %c0_15 = arith.constant 0 : index
    %c0_16 = arith.constant 0 : index
    %c0_17 = arith.constant 0 : index
    %23 = vector.load %arg9[%c0_15, %c0_16, %c0_17] : memref<10x10x4xf32, #tpu.memory_space<vmem>>, vector<10x10x4xf32>
    %24 = vector.extract_strided_slice %23 {offsets = [0, 0, 0], sizes = [8, 8, 4], strides = [1, 1, 1]} : vector<10x10x4xf32> to vector<8x8x4xf32>
    %25 = vector.extract_strided_slice %23 {offsets = [0, 1, 0], sizes = [8, 8, 4], strides = [1, 1, 1]} : vector<10x10x4xf32> to vector<8x8x4xf32>
    %26 = vector.extract_strided_slice %23 {offsets = [0, 2, 0], sizes = [8, 8, 4], strides = [1, 1, 1]} : vector<10x10x4xf32> to vector<8x8x4xf32>
    %27 = vector.extract_strided_slice %23 {offsets = [1, 0, 0], sizes = [8, 8, 4], strides = [1, 1, 1]} : vector<10x10x4xf32> to vector<8x8x4xf32>
    %28 = vector.extract_strided_slice %23 {offsets = [1, 1, 0], sizes = [8, 8, 4], strides = [1, 1, 1]} : vector<10x10x4xf32> to vector<8x8x4xf32>
    %29 = vector.extract_strided_slice %23 {offsets = [1, 2, 0], sizes = [8, 8, 4], strides = [1, 1, 1]} : vector<10x10x4xf32> to vector<8x8x4xf32>
    %30 = vector.extract_strided_slice %23 {offsets = [2, 0, 0], sizes = [8, 8, 4], strides = [1, 1, 1]} : vector<10x10x4xf32> to vector<8x8x4xf32>
    %31 = vector.extract_strided_slice %23 {offsets = [2, 1, 0], sizes = [8, 8, 4], strides = [1, 1, 1]} : vector<10x10x4xf32> to vector<8x8x4xf32>
    %32 = vector.extract_strided_slice %23 {offsets = [2, 2, 0], sizes = [8, 8, 4], strides = [1, 1, 1]} : vector<10x10x4xf32> to vector<8x8x4xf32>
    %33 = tpu.concatenate %24, %25, %26, %27, %28, %29, %30, %31, %32 in 2 : vector<8x8x4xf32>, vector<8x8x4xf32>, vector<8x8x4xf32>, vector<8x8x4xf32>, vector<8x8x4xf32>, vector<8x8x4xf32>, vector<8x8x4xf32>, vector<8x8x4xf32>, vector<8x8x4xf32> -> vector<8x8x36xf32>
    %c0_18 = arith.constant 0 : index
    %c0_19 = arith.constant 0 : index
    %34 = vector.load %arg5[%c0_18, %c0_19] : memref<2x8xf32, #tpu.memory_space<vmem>>, vector<2x8xf32>
    %c0_20 = arith.constant 0 : index
    %c0_21 = arith.constant 0 : index
    %35 = vector.load %arg4[%c0_20, %c0_21] : memref<36x8xf32, #tpu.memory_space<vmem>>, vector<36x8xf32>
    %cst_22 = arith.constant dense<0.000000e+00> : vector<8x8x8xf32>
    %36 = tpu.matmul %33, %35, %cst_22 {dimension_numbers = #tpu.dot_dimension_numbers<[2], [0], [0, 1], [1], [0, 0, 0, 1, 1, 1], [], []>} : vector<8x8x36xf32>, vector<36x8xf32>, vector<8x8x8xf32> -> vector<8x8x8xf32>
    %37 = vector.extract_strided_slice %34 {offsets = [0, 0], sizes = [1, 8], strides = [1, 1]} : vector<2x8xf32> to vector<1x8xf32>
    %38 = vector.shape_cast %37 : vector<1x8xf32> to vector<1x1x8xf32>
    %39 = vector.broadcast %38 : vector<1x1x8xf32> to vector<8x8x8xf32>
    %40 = arith.mulf %36, %39 : vector<8x8x8xf32>
    %41 = vector.extract_strided_slice %34 {offsets = [1, 0], sizes = [1, 8], strides = [1, 1]} : vector<2x8xf32> to vector<1x8xf32>
    %42 = vector.shape_cast %41 : vector<1x8xf32> to vector<1x1x8xf32>
    %43 = vector.broadcast %42 : vector<1x1x8xf32> to vector<8x8x8xf32>
    %44 = arith.addf %40, %43 : vector<8x8x8xf32>
    %cst_23 = arith.constant 0.000000e+00 : f32
    %45 = vector.broadcast %cst_23 : f32 to vector<8x8x8xf32>
    %46 = arith.maximumf %44, %45 : vector<8x8x8xf32>
    %cst_24 = arith.constant 0.000000e+00 : f32
    %47 = vector.broadcast %cst_24 : f32 to vector<10x10x8xf32>
    %c0_25 = arith.constant 0 : index
    %c0_26 = arith.constant 0 : index
    %c0_27 = arith.constant 0 : index
    %48 = vector.load %arg10[%c0_25, %c0_26, %c0_27] : memref<10x10x8xf32, #tpu.memory_space<vmem>>, vector<10x10x8xf32>
    tpu.vector_store %arg10[%c0_25, %c0_26, %c0_27], %47 {strides = array<i32>} : memref<10x10x8xf32, #tpu.memory_space<vmem>>, vector<10x10x8xf32>,
    %c1_28 = arith.constant 1 : index
    %c1_29 = arith.constant 1 : index
    %c0_30 = arith.constant 0 : index
    %49 = vector.load %arg10[%c1_28, %c1_29, %c0_30] : memref<10x10x8xf32, #tpu.memory_space<vmem>>, vector<8x8x8xf32>
    tpu.vector_store %arg10[%c1_28, %c1_29, %c0_30], %46 {strides = array<i32>} : memref<10x10x8xf32, #tpu.memory_space<vmem>>, vector<8x8x8xf32>,
    %c0_31 = arith.constant 0 : index
    %c0_32 = arith.constant 0 : index
    %c0_33 = arith.constant 0 : index
    %50 = vector.load %arg10[%c0_31, %c0_32, %c0_33] : memref<10x10x8xf32, #tpu.memory_space<vmem>>, vector<10x10x8xf32>
    %51 = vector.extract_strided_slice %50 {offsets = [0, 0, 0], sizes = [8, 8, 8], strides = [1, 1, 1]} : vector<10x10x8xf32> to vector<8x8x8xf32>
    %52 = vector.extract_strided_slice %50 {offsets = [0, 1, 0], sizes = [8, 8, 8], strides = [1, 1, 1]} : vector<10x10x8xf32> to vector<8x8x8xf32>
    %53 = vector.extract_strided_slice %50 {offsets = [0, 2, 0], sizes = [8, 8, 8], strides = [1, 1, 1]} : vector<10x10x8xf32> to vector<8x8x8xf32>
    %54 = vector.extract_strided_slice %50 {offsets = [1, 0, 0], sizes = [8, 8, 8], strides = [1, 1, 1]} : vector<10x10x8xf32> to vector<8x8x8xf32>
    %55 = vector.extract_strided_slice %50 {offsets = [1, 1, 0], sizes = [8, 8, 8], strides = [1, 1, 1]} : vector<10x10x8xf32> to vector<8x8x8xf32>
    %56 = vector.extract_strided_slice %50 {offsets = [1, 2, 0], sizes = [8, 8, 8], strides = [1, 1, 1]} : vector<10x10x8xf32> to vector<8x8x8xf32>
    %57 = vector.extract_strided_slice %50 {offsets = [2, 0, 0], sizes = [8, 8, 8], strides = [1, 1, 1]} : vector<10x10x8xf32> to vector<8x8x8xf32>
    %58 = vector.extract_strided_slice %50 {offsets = [2, 1, 0], sizes = [8, 8, 8], strides = [1, 1, 1]} : vector<10x10x8xf32> to vector<8x8x8xf32>
    %59 = vector.extract_strided_slice %50 {offsets = [2, 2, 0], sizes = [8, 8, 8], strides = [1, 1, 1]} : vector<10x10x8xf32> to vector<8x8x8xf32>
    %60 = tpu.concatenate %51, %52, %53, %54, %55, %56, %57, %58, %59 in 2 : vector<8x8x8xf32>, vector<8x8x8xf32>, vector<8x8x8xf32>, vector<8x8x8xf32>, vector<8x8x8xf32>, vector<8x8x8xf32>, vector<8x8x8xf32>, vector<8x8x8xf32>, vector<8x8x8xf32> -> vector<8x8x72xf32>
    %61 = vector.shape_cast %60 : vector<8x8x72xf32> to vector<64x72xf32>
    %c0_34 = arith.constant 0 : index
    %c0_35 = arith.constant 0 : index
    %62 = vector.load %arg7[%c0_34, %c0_35] : memref<8x2xf32, #tpu.memory_space<vmem>>, vector<8x2xf32>
    %c0_36 = arith.constant 0 : index
    %c0_37 = arith.constant 0 : index
    %63 = vector.load %arg6[%c0_36, %c0_37] : memref<8x72xf32, #tpu.memory_space<vmem>>, vector<8x72xf32>
    %cst_38 = arith.constant dense<0.000000e+00> : vector<8x64xf32>
    %64 = tpu.matmul %63, %61, %cst_38 {dimension_numbers = #tpu.dot_dimension_numbers<[1], [1], [0], [0], [0, 0, 1, 0], [], []>} : vector<8x72xf32>, vector<64x72xf32>, vector<8x64xf32> -> vector<8x64xf32>
    %65 = vector.extract_strided_slice %62 {offsets = [0, 0], sizes = [8, 1], strides = [1, 1]} : vector<8x2xf32> to vector<8x1xf32>
    %66 = vector.broadcast %65 : vector<8x1xf32> to vector<8x64xf32>
    %67 = arith.mulf %64, %66 : vector<8x64xf32>
    %68 = vector.extract_strided_slice %62 {offsets = [0, 1], sizes = [8, 1], strides = [1, 1]} : vector<8x2xf32> to vector<8x1xf32>
    %69 = vector.broadcast %68 : vector<8x1xf32> to vector<8x64xf32>
    %70 = arith.addf %67, %69 : vector<8x64xf32>
    %cst_39 = arith.constant 0.000000e+00 : f32
    %71 = vector.broadcast %cst_39 : f32 to vector<8x64xf32>
    %72 = arith.maximumf %70, %71 : vector<8x64xf32>
    %c0_40 = arith.constant 0 : index
    %c0_41 = arith.constant 0 : index
    %c0_42 = arith.constant 0 : index
    %73 = vector.load %arg8[%c0_40, %c0_41, %c0_42] : memref<1x8x64xf32, #tpu.memory_space<vmem>>, vector<1x8x64xf32>
    %74 = vector.shape_cast %73 : vector<1x8x64xf32> to vector<8x64xf32>
    %75 = vector.shape_cast %72 : vector<8x64xf32> to vector<1x8x64xf32>
    tpu.vector_store %arg8[%c0_40, %c0_41, %c0_42], %75 {strides = array<i32>} : memref<1x8x64xf32, #tpu.memory_space<vmem>>, vector<1x8x64xf32>,
    return
  }
  func.func @transform_0(%arg0: i32) -> (i32, i32, i32, i32, i32) {
    %c0_i32 = arith.constant 0 : i32
    %c0_i32_0 = arith.constant 0 : i32
    %c0_i32_1 = arith.constant 0 : i32
    %c0_i32_2 = arith.constant 0 : i32
    %c0_i32_3 = arith.constant 0 : i32
    return %arg0, %c0_i32, %c0_i32_0, %c0_i32_1, %c0_i32_2 : i32, i32, i32, i32, i32
  }
  func.func @transform_1(%arg0: i32) -> (i32, i32) {
    %c0_i32 = arith.constant 0 : i32
    %c0_i32_0 = arith.constant 0 : i32
    %c0_i32_1 = arith.constant 0 : i32
    return %c0_i32, %c0_i32_0 : i32, i32
  }
  func.func @transform_2(%arg0: i32) -> (i32, i32) {
    %c0_i32 = arith.constant 0 : i32
    %c0_i32_0 = arith.constant 0 : i32
    %c0_i32_1 = arith.constant 0 : i32
    return %c0_i32, %c0_i32_0 : i32, i32
  }
  func.func @transform_3(%arg0: i32) -> (i32, i32) {
    %c0_i32 = arith.constant 0 : i32
    %c0_i32_0 = arith.constant 0 : i32
    %c0_i32_1 = arith.constant 0 : i32
    return %c0_i32, %c0_i32_0 : i32, i32
  }
  func.func @transform_4(%arg0: i32) -> (i32, i32) {
    %c0_i32 = arith.constant 0 : i32
    %c0_i32_0 = arith.constant 0 : i32
    %c0_i32_1 = arith.constant 0 : i32
    return %c0_i32, %c0_i32_0 : i32, i32
  }
  func.func @transform_5(%arg0: i32) -> (i32, i32) {
    %c0_i32 = arith.constant 0 : i32
    %c0_i32_0 = arith.constant 0 : i32
    %c0_i32_1 = arith.constant 0 : i32
    return %c0_i32, %c0_i32_0 : i32, i32
  }
  func.func @transform_6(%arg0: i32) -> (i32, i32) {
    %c0_i32 = arith.constant 0 : i32
    %c0_i32_0 = arith.constant 0 : i32
    %c0_i32_1 = arith.constant 0 : i32
    return %c0_i32, %c0_i32_0 : i32, i32
  }
  func.func @transform_7(%arg0: i32) -> (i32, i32, i32) {
    %c0_i32 = arith.constant 0 : i32
    %c0_i32_0 = arith.constant 0 : i32
    %c0_i32_1 = arith.constant 0 : i32
    return %arg0, %c0_i32, %c0_i32_0 : i32, i32, i32
  }
}

</mosaic_0001>

<llo_original>
// kernel: tpu_custom_call.1
$region0: #{tpu_custom_call.1}
  #allocation0 [shape = 'u32[]', space=smem, size = 0x4, offset = 0x4, fixed_abs, tag = 'smem constant byte address 0x4 - core index']
  #allocation1 [shape = 'u32[144,128]{1,0:T(1,128)}', space=vmem, size = 0x12000, scoped, tag = 'internal scratch']
  #allocation2 [shape = 'f32[10,10,4]{2,1,0:T(8,128)}', space=vmem, size = 0x14000, scoped, tag = 'scratch operand']
  #allocation3 [shape = 'f32[10,10,8]{2,1,0:T(8,128)}', space=vmem, size = 0x14000, scoped, tag = 'scratch operand']
  %s0 = inlined_call_operand.hbm [shape: f32[2,8,2,8,8], index: 0, kind: input, shape index: {}]
  %s1 = inlined_call_operand.vmem [shape: f32[16,4], index: 1, kind: input, shape index: {}]
  %s2 = inlined_call_operand.vmem [shape: f32[2,4], index: 2, kind: input, shape index: {}]
  %s3 = inlined_call_operand.vmem [shape: f32[36,8], index: 3, kind: input, shape index: {}]
  %s4 = inlined_call_operand.vmem [shape: f32[2,8], index: 4, kind: input, shape index: {}]
  %s5 = inlined_call_operand.vmem [shape: f32[8,72], index: 5, kind: input, shape index: {}]
  %s6 = inlined_call_operand.vmem [shape: f32[8,2], index: 6, kind: input, shape index: {}]
  %s7 = inlined_call_operand.hbm [shape: f32[2,8,64], index: 7, kind: output, shape index: {}]
  %s8 = sld [smem:[#allocation0]]
  $region65: #{tpu_custom_call.1} parent=0
    _
  %s10 = ssub.s32 1, %s8
  %s11 = scalar_select 0, %s10, %s8
  $region1: #{tpu_custom_call.1} parent=0
    #allocation4 [shape = 'u8[131072]{0}', space=vmem, size = 0x20000, scoped, tag = 'input window, operand 0']
    #allocation5 [shape = 's32[2]{0}', space=sflag, size = 0x8, scoped, tag = 'scoped memory for tpu_custom_call.1']
    #allocation6 [shape = 's32[2]{0}', space=sflag, size = 0x8, scoped, tag = 'scoped memory for tpu_custom_call.1']
    #allocation7 [shape = 'u8[8192]{0}', space=vmem, size = 0x2000, scoped, tag = 'output window, operand 0']
    %12 = vsyncpa [#allocation5], 0
    %s13 = scalar_lea.sflag [#allocation5], 1
    %14 = vsyncpa %s13, 0
    %15 = vsyncpa [#allocation6], 0
    %s16 = scalar_lea.sflag [#allocation6], 1
    %17 = vsyncpa %s16, 0
    loop: start=0, step=1, limit=4
    $region2: #{tpu_custom_call.1} parent=1 // loop_pre_header
      _
    $region3: #{tpu_custom_call.1} parent=1 // loop_header
      %s19 = sphi 0, %s23
      %p20 = scmp.ge.s32.totalorder %s19, 4
      %s29 = sphi 0, %s31
      %s32 = sphi 0, %s29
      %s33 = sphi 0, %s32
      %s49 = sphi 0, %s33
      %s53 = sphi 0, %s53
      %s55 = sphi 0, %s53
      %s56 = sphi 0, %s55
      %s70 = sphi 0, %s56
      %s74 = sphi 0, %s74
      %s76 = sphi 0, %s74
      %s77 = sphi 0, %s76
      %s91 = sphi 0, %s77
      %s95 = sphi 0, %s95
      %s97 = sphi 0, %s95
      %s98 = sphi 0, %s97
      %s112 = sphi 0, %s98
      %s116 = sphi 0, %s116
      %s118 = sphi 0, %s116
      %s119 = sphi 0, %s118
      %s133 = sphi 0, %s119
      %s137 = sphi 0, %s137
      %s139 = sphi 0, %s137
      %s140 = sphi 0, %s139
      %s154 = sphi 0, %s140
      %s158 = sphi 0, %s158
      %s160 = sphi 0, %s158
      %s161 = sphi 0, %s160
      %s175 = sphi 0, %s161
      %s181 = sphi 0, %s183
      %s184 = sphi 0, %s181
      %s185 = sphi 0, %s184
      %s201 = sphi 0, %s185
    $region4: #{tpu_custom_call.1} parent=1 // loop_header_branch
      %22 = sbr.rel (%p20) target = $region8
    $region5: #{tpu_custom_call.1} parent=1 // loop_body
      %s24 = ssub.s32 %s19, 1
      %s25 = ssub.s32 %s19, 2
      %s26 = sadd.s32 %s19, 1
      %s27 = ssub.s32 %s19, %s26
      %p28 = scmp.eq.s32.totalorder %s27, 0
      %s30 = sadd.s32 %s29, 1
      %s31 = scalar_select %p28, %s29, %s30
      %p34 = pneg %p28
      %p35 = scmp.eq.s32.totalorder %s19, 1
      %p36 = por %p34, %p35
      %p37 = scmp.ne.s32.totalorder %s29, %s32
      %p38 = scmp.eq.s32.totalorder %s19, 0
      %p39 = por %p37, %p38
      %p40 = scmp.ne.s32.totalorder %s29, %s32
      %p41 = scmp.eq.s32.totalorder %s24, 1
      %p42 = por %p40, %p41
      %p43 = scmp.ne.s32.totalorder %s32, %s33
      %p44 = scmp.eq.s32.totalorder %s24, 0
      %p45 = por %p43, %p44
      %p46 = scmp.ne.s32.totalorder %s32, %s33
      %p47 = scmp.eq.s32.totalorder %s25, 1
      %p48 = por %p46, %p47
      %p50 = scmp.ne.s32.totalorder %s33, %s49
      %p51 = scmp.eq.s32.totalorder %s25, 0
      %p52 = por %p50, %p51
      %s54 = sadd.s32 %s53, 1
      %p57 = scmp.eq.s32.totalorder %s19, 1
      %p58 = scmp.ne.s32.totalorder %s53, %s55
      %p59 = scmp.eq.s32.totalorder %s19, 0
      %p60 = por %p58, %p59
      %p61 = scmp.ne.s32.totalorder %s53, %s55
      %p62 = scmp.eq.s32.totalorder %s24, 1
      %p63 = por %p61, %p62
      %p64 = scmp.ne.s32.totalorder %s55, %s56
      %p65 = scmp.eq.s32.totalorder %s24, 0
      %p66 = por %p64, %p65
      %p67 = scmp.ne.s32.totalorder %s55, %s56
      %p68 = scmp.eq.s32.totalorder %s25, 1
      %p69 = por %p67, %p68
      %p71 = scmp.ne.s32.totalorder %s56, %s70
      %p72 = scmp.eq.s32.totalorder %s25, 0
      %p73 = por %p71, %p72
      %s75 = sadd.s32 %s74, 1
      %p78 = scmp.eq.s32.totalorder %s19, 1
      %p79 = scmp.ne.s32.totalorder %s74, %s76
      %p80 = scmp.eq.s32.totalorder %s19, 0
      %p81 = por %p79, %p80
      %p82 = scmp.ne.s32.totalorder %s74, %s76
      %p83 = scmp.eq.s32.totalorder %s24, 1
      %p84 = por %p82, %p83
      %p85 = scmp.ne.s32.totalorder %s76, %s77
      %p86 = scmp.eq.s32.totalorder %s24, 0
      %p87 = por %p85, %p86
      %p88 = scmp.ne.s32.totalorder %s76, %s77
      %p89 = scmp.eq.s32.totalorder %s25, 1
      %p90 = por %p88, %p89
      %p92 = scmp.ne.s32.totalorder %s77, %s91
      %p93 = scmp.eq.s32.totalorder %s25, 0
      %p94 = por %p92, %p93
      %s96 = sadd.s32 %s95, 1
      %p99 = scmp.eq.s32.totalorder %s19, 1
      %p100 = scmp.ne.s32.totalorder %s95, %s97
      %p101 = scmp.eq.s32.totalorder %s19, 0
      %p102 = por %p100, %p101
      %p103 = scmp.ne.s32.totalorder %s95, %s97
      %p104 = scmp.eq.s32.totalorder %s24, 1
      %p105 = por %p103, %p104
      %p106 = scmp.ne.s32.totalorder %s97, %s98
      %p107 = scmp.eq.s32.totalorder %s24, 0
      %p108 = por %p106, %p107
      %p109 = scmp.ne.s32.totalorder %s97, %s98
      %p110 = scmp.eq.s32.totalorder %s25, 1
      %p111 = por %p109, %p110
      %p113 = scmp.ne.s32.totalorder %s98, %s112
      %p114 = scmp.eq.s32.totalorder %s25, 0
      %p115 = por %p113, %p114
      %s117 = sadd.s32 %s116, 1
      %p120 = scmp.eq.s32.totalorder %s19, 1
      %p121 = scmp.ne.s32.totalorder %s116, %s118
      %p122 = scmp.eq.s32.totalorder %s19, 0
      %p123 = por %p121, %p122
      %p124 = scmp.ne.s32.totalorder %s116, %s118
      %p125 = scmp.eq.s32.totalorder %s24, 1
      %p126 = por %p124, %p125
      %p127 = scmp.ne.s32.totalorder %s118, %s119
      %p128 = scmp.eq.s32.totalorder %s24, 0
      %p129 = por %p127, %p128
      %p130 = scmp.ne.s32.totalorder %s118, %s119
      %p131 = scmp.eq.s32.totalorder %s25, 1
      %p132 = por %p130, %p131
      %p134 = scmp.ne.s32.totalorder %s119, %s133
      %p135 = scmp.eq.s32.totalorder %s25, 0
      %p136 = por %p134, %p135
      %s138 = sadd.s32 %s137, 1
      %p141 = scmp.eq.s32.totalorder %s19, 1
      %p142 = scmp.ne.s32.totalorder %s137, %s139
      %p143 = scmp.eq.s32.totalorder %s19, 0
      %p144 = por %p142, %p143
      %p145 = scmp.ne.s32.totalorder %s137, %s139
      %p146 = scmp.eq.s32.totalorder %s24, 1
      %p147 = por %p145, %p146
      %p148 = scmp.ne.s32.totalorder %s139, %s140
      %p149 = scmp.eq.s32.totalorder %s24, 0
      %p150 = por %p148, %p149
      %p151 = scmp.ne.s32.totalorder %s139, %s140
      %p152 = scmp.eq.s32.totalorder %s25, 1
      %p153 = por %p151, %p152
      %p155 = scmp.ne.s32.totalorder %s140, %s154
      %p156 = scmp.eq.s32.totalorder %s25, 0
      %p157 = por %p155, %p156
      %s159 = sadd.s32 %s158, 1
      %p162 = scmp.eq.s32.totalorder %s19, 1
      %p163 = scmp.ne.s32.totalorder %s158, %s160
      %p164 = scmp.eq.s32.totalorder %s19, 0
      %p165 = por %p163, %p164
      %p166 = scmp.ne.s32.totalorder %s158, %s160
      %p167 = scmp.eq.s32.totalorder %s24, 1
      %p168 = por %p166, %p167
      %p169 = scmp.ne.s32.totalorder %s160, %s161
      %p170 = scmp.eq.s32.totalorder %s24, 0
      %p171 = por %p169, %p170
      %p172 = scmp.ne.s32.totalorder %s160, %s161
      %p173 = scmp.eq.s32.totalorder %s25, 1
      %p174 = por %p172, %p173
      %p176 = scmp.ne.s32.totalorder %s161, %s175
      %p177 = scmp.eq.s32.totalorder %s25, 0
      %p178 = por %p176, %p177
      %s179 = ssub.s32 %s19, %s26
      %p180 = scmp.eq.s32.totalorder %s179, 0
      %s182 = sadd.s32 %s181, 1
      %s183 = scalar_select %p180, %s181, %s182
      %p186 = pneg %p180
      %p187 = scmp.eq.s32.totalorder %s19, 1
      %p188 = por %p186, %p187
      %p189 = scmp.ne.s32.totalorder %s181, %s184
      %p190 = scmp.eq.s32.totalorder %s19, 0
      %p191 = por %p189, %p190
      %p192 = scmp.ne.s32.totalorder %s181, %s184
      %p193 = scmp.eq.s32.totalorder %s24, 1
      %p194 = por %p192, %p193
      %p195 = scmp.ne.s32.totalorder %s184, %s185
      %p196 = scmp.eq.s32.totalorder %s24, 0
      %p197 = por %p195, %p196
      %p198 = scmp.ne.s32.totalorder %s184, %s185
      %p199 = scmp.eq.s32.totalorder %s25, 1
      %p200 = por %p198, %p199
      %p202 = scmp.ne.s32.totalorder %s185, %s201
      %p203 = scmp.eq.s32.totalorder %s25, 0
      %p204 = por %p202, %p203
      %p205 = scmp.le.s32.totalorder 1, %s19
      %p206 = scmp.lt.s32.totalorder %s19, 3
      %p207 = pnand %p205, %p206
      %p208 = pneg %p207
      // Predicated region
      $region9: #{tpu_custom_call.1} parent=5 // pred_check
        _
      $region10: #{tpu_custom_call.1} parent=5 // pred_check_branch
        %210 = sbr.rel (%p207) target = $region12
      $region11: #{tpu_custom_call.1} parent=5 // pred_region
        %s211 = ssub.s32 %s19, 1
        // Predicated region
        $region13: #{tpu_custom_call.1} parent=11 // pred_check
          %p212 = pneg %p66
        $region14: #{tpu_custom_call.1} parent=11 // pred_check_branch
          %214 = sbr.rel (%p212) target = $region16
        $region15: #{tpu_custom_call.1} parent=11 // pred_region
          _
        $region16: #{tpu_custom_call.1} parent=11 // pred_fallthru
          _
        // Predicated region
        $region17: #{tpu_custom_call.1} parent=11 // pred_check
          %p215 = pneg %p87
        $region18: #{tpu_custom_call.1} parent=11 // pred_check_branch
          %217 = sbr.rel (%p215) target = $region20
        $region19: #{tpu_custom_call.1} parent=11 // pred_region
          _
        $region20: #{tpu_custom_call.1} parent=11 // pred_fallthru
          _
        // Predicated region
        $region21: #{tpu_custom_call.1} parent=11 // pred_check
          %p218 = pneg %p108
        $region22: #{tpu_custom_call.1} parent=11 // pred_check_branch
          %220 = sbr.rel (%p218) target = $region24
        $region23: #{tpu_custom_call.1} parent=11 // pred_region
          _
        $region24: #{tpu_custom_call.1} parent=11 // pred_fallthru
          _
        // Predicated region
        $region25: #{tpu_custom_call.1} parent=11 // pred_check
          %p221 = pneg %p129
        $region26: #{tpu_custom_call.1} parent=11 // pred_check_branch
          %223 = sbr.rel (%p221) target = $region28
        $region27: #{tpu_custom_call.1} parent=11 // pred_region
          _
        $region28: #{tpu_custom_call.1} parent=11 // pred_fallthru
          _
        // Predicated region
        $region29: #{tpu_custom_call.1} parent=11 // pred_check
          %p224 = pneg %p150
        $region30: #{tpu_custom_call.1} parent=11 // pred_check_branch
          %226 = sbr.rel (%p224) target = $region32
        $region31: #{tpu_custom_call.1} parent=11 // pred_region
          _
        $region32: #{tpu_custom_call.1} parent=11 // pred_fallthru
          _
        // Predicated region
        $region33: #{tpu_custom_call.1} parent=11 // pred_check
          %p227 = pneg %p171
        $region34: #{tpu_custom_call.1} parent=11 // pred_check_branch
          %229 = sbr.rel (%p227) target = $region36
        $region35: #{tpu_custom_call.1} parent=11 // pred_region
          _
        $region36: #{tpu_custom_call.1} parent=11 // pred_fallthru
          _
      $region12: #{tpu_custom_call.1} parent=5 // pred_fallthru
        _
      %p230 = scmp.lt.s32.totalorder %s19, 2
      // Predicated region
      $region37: #{tpu_custom_call.1} parent=5 // pred_check
        %p231 = pneg %p230
      $region38: #{tpu_custom_call.1} parent=5 // pred_check_branch
        %233 = sbr.rel (%p231) target = $region40
      $region39: #{tpu_custom_call.1} parent=5 // pred_region
        // Predicated region
        $region41: #{tpu_custom_call.1} parent=39 // pred_check
          %p234 = pneg %p39
        $region42: #{tpu_custom_call.1} parent=39 // pred_check_branch
          %236 = sbr.rel (%p234) target = $region44
        $region43: #{tpu_custom_call.1} parent=39 // pred_region
          %s237 = sand.u32 %s29, 1
          %s238 = scalar_lea.sflag [#allocation5], %s237
          %s239 = sand.u32 %s29, 1
          %s240 = smul.addr %s239, 128
          %s241 = scalar_lea.vmem [#allocation4], %s240
          %s243 = ssub.s32 2048, 2048
          %244 = vsyncadd %s238, %s243
          %s245 = smul.addr %s19, 16
          %s246 = smul.addr %s245, 128
          %s247 = scalar_lea.hbm %s0, %s246
          %s248 = sshll.u32 %s241, 4
          %s249 = int_to_ptr.vmem [resolvable:$true] %s248
          %254 = dma.hbm_to_vmem [thread:$0]  %s247, 2048, %s249, %s238, 128, 128, 8
        $region44: #{tpu_custom_call.1} parent=39 // pred_fallthru
          _
      $region40: #{tpu_custom_call.1} parent=5 // pred_fallthru
        _
      %p255 = scmp.le.s32.totalorder 1, %s19
      %p256 = scmp.lt.s32.totalorder %s19, 3
      %p257 = pnand %p255, %p256
      %p258 = pneg %p257
      // Predicated region
      $region45: #{tpu_custom_call.1} parent=5 // pred_check
        _
      $region46: #{tpu_custom_call.1} parent=5 // pred_check_branch
        %260 = sbr.rel (%p257) target = $region48
      $region47: #{tpu_custom_call.1} parent=5 // pred_region
        %s261 = ssub.s32 %s19, 1
        %s262 = sand.u32 %s32, 1
        %s263 = scalar_lea.sflag [#allocation5], %s262
        %s264 = sand.u32 %s32, 1
        %s265 = smul.addr %s264, 128
        %s266 = scalar_lea.vmem [#allocation4], %s265
        // Predicated region
        $region49: #{tpu_custom_call.1} parent=47 // pred_check
          %p267 = pneg %p45
        $region50: #{tpu_custom_call.1} parent=47 // pred_check_branch
          %269 = sbr.rel (%p267) target = $region52
        $region51: #{tpu_custom_call.1} parent=47 // pred_region
          %270 = dma.done %s263, 2048
        $region52: #{tpu_custom_call.1} parent=47 // pred_fallthru
          _
        %s271 = sand.u32 %s32, 1
        %s272 = scalar_lea.sflag [#allocation5], %s271
        %s273 = sand.u32 %s32, 1
        %s274 = smul.addr %s273, 128
        %s275 = scalar_lea.vmem [#allocation4], %s274
        %p276 = pneg %p45
        %p277 = pneg %p42
        %p278 = pneg %p66
        %p279 = pneg %p63
        %p280 = pneg %p87
        %p281 = pneg %p84
        %p282 = pneg %p108
        %p283 = pneg %p105
        %p284 = pneg %p129
        %p285 = pneg %p126
        %p286 = pneg %p150
        %p287 = pneg %p147
        %p288 = pneg %p171
        %p289 = pneg %p168
        %p290 = pneg %p197
        %p291 = pneg %p194
        %s292 = sand.u32 %s184, 1
        %s293 = scalar_lea.sflag [#allocation6], %s292
        %s294 = sand.u32 %s184, 1
        %s295 = smul.addr %s294, 8
        %s296 = scalar_lea.vmem [#allocation7], %s295
        %v297 = vld [vmem:[%s266] sm:$0xff]
        %v298 = vld [vmem:[%s266 + $0x8] sm:$0xff]
        %v299 = vld [vmem:[%s266 + $0x10] sm:$0xff]
        %v300 = vld [vmem:[%s266 + $0x18] sm:$0xff]
        %v301 = vld [vmem:[%s266 + $0x20] sm:$0xff]
        %v302 = vld [vmem:[%s266 + $0x28] sm:$0xff]
        %v303 = vld [vmem:[%s266 + $0x30] sm:$0xff]
        %v304 = vld [vmem:[%s266 + $0x38] sm:$0xff]
        %v305 = vld [vmem:[%s266 + $0x40] sm:$0xff]
        %v306 = vld [vmem:[%s266 + $0x48] sm:$0xff]
        %v307 = vld [vmem:[%s266 + $0x50] sm:$0xff]
        %v308 = vld [vmem:[%s266 + $0x58] sm:$0xff]
        %v309 = vld [vmem:[%s266 + $0x60] sm:$0xff]
        %v310 = vld [vmem:[%s266 + $0x68] sm:$0xff]
        %v311 = vld [vmem:[%s266 + $0x70] sm:$0xff]
        %v312 = vld [vmem:[%s266 + $0x78] sm:$0xff]
        %321 = vrot.lane.b32.xlu0 %v298, 8
        %v322 = vpop.permute.xlu0 %321
        %323 = vrot.lane.b32.xlu0 %v300, 8
        %v324 = vpop.permute.xlu0 %323
        %325 = vrot.lane.b32.xlu0 %v302, 8
        %v326 = vpop.permute.xlu0 %325
        %327 = vrot.lane.b32.xlu0 %v304, 8
        %v328 = vpop.permute.xlu0 %327
        %329 = vrot.lane.b32.xlu0 %v306, 8
        %v330 = vpop.permute.xlu0 %329
        %331 = vrot.lane.b32.xlu0 %v308, 8
        %v332 = vpop.permute.xlu0 %331
        %333 = vrot.lane.b32.xlu0 %v310, 8
        %v334 = vpop.permute.xlu0 %333
        %335 = vrot.lane.b32.xlu0 %v312, 8
        %v336 = vpop.permute.xlu0 %335
        %vm345 = vcmask 64512
        %v346 = vsel %vm345, %v297, %v322
        %v347 = vsel %vm345, %v299, %v324
        %v348 = vsel %vm345, %v301, %v326
        %v349 = vsel %vm345, %v303, %v328
        %v350 = vsel %vm345, %v305, %v330
        %v351 = vsel %vm345, %v307, %v332
        %v352 = vsel %vm345, %v309, %v334
        %v353 = vsel %vm345, %v311, %v336
        %v354 = vld [vmem:[%s2] sm:$0x3]
        %v355 = vld [vmem:[%s1] sm:$0xff]
        %v356 = vld [vmem:[%s1 + $0x8] sm:$0xff]
        %vm357 = vcmask 130048
        %v359 = vsel %vm357, %v346, 0
        %v362 = vsel %vm357, %v347, 0
        %v365 = vsel %vm357, %v348, 0
        %v368 = vsel %vm357, %v349, 0
        %v371 = vsel %vm357, %v350, 0
        %v374 = vsel %vm357, %v351, 0
        %v377 = vsel %vm357, %v352, 0
        %v380 = vsel %vm357, %v353, 0
        %382 = vmatprep.subr.mxu0 0.0
        %383 = vmatpush1.msra.mxu0 0.0
        %384 = vmatprep.subr.mxu0 0.0
        %385 = vmatpush1.msra.mxu0 0.0
        %386 = vmatprep.subr.mxu0 0.0
        %387 = vmatpush1.msra.mxu0 0.0
        %388 = vmatprep.subr.mxu0 0.0
        %389 = vmatpush1.msra.mxu0 0.0
        %390 = vmatprep.subr.mxu0 0.0
        %391 = vmatpush1.msra.mxu0 0.0
        %392 = vmatprep.subr.mxu0 0.0
        %393 = vmatpush1.msra.mxu0 0.0
        %394 = vmatprep.subr.mxu0 0.0
        %395 = vmatpush1.msra.mxu0 0.0
        %396 = vmatprep.subr.mxu0 0.0
        %397 = vmatpush1.msra.mxu0 0.0
        %398 = vmatprep.subr.mxu0 0.0
        %399 = vmatpush1.msra.mxu0 0.0
        %400 = vmatprep.subr.mxu0 0.0
        %401 = vmatpush1.msra.mxu0 0.0
        %402 = vmatprep.subr.mxu0 0.0
        %403 = vmatpush1.msra.mxu0 0.0
        %404 = vmatprep.subr.mxu0 0.0
        %405 = vmatpush1.msra.mxu0 0.0
        %406 = vmatprep.subr.mxu0 0.0
        %407 = vmatpush1.msra.mxu0 0.0
        %408 = vmatprep.subr.mxu0 0.0
        %409 = vmatpush1.msra.mxu0 0.0
        %410 = vmatprep.subr.mxu0 0.0
        %411 = vmatpush1.msra.mxu0 %v356
        %412 = vmatprep.subr.mxu0 0.0
        %413 = vmatpush1.msra.mxu0 %v355
        %414 = vmatprep.subr.mxu0 0.0
        %415 = vmatpush2.msra.mxu0 0.0
        %416 = vmatprep.subr.mxu0 0.0
        %417 = vmatpush2.msra.mxu0 0.0
        %418 = vmatprep.subr.mxu0 0.0
        %419 = vmatpush2.msra.mxu0 0.0
        %420 = vmatprep.subr.mxu0 0.0
        %421 = vmatpush2.msra.mxu0 0.0
        %422 = vmatprep.subr.mxu0 0.0
        %423 = vmatpush2.msra.mxu0 0.0
        %424 = vmatprep.subr.mxu0 0.0
        %425 = vmatpush2.msra.mxu0 0.0
        %426 = vmatprep.subr.mxu0 0.0
        %427 = vmatpush2.msra.mxu0 0.0
        %428 = vmatprep.subr.mxu0 0.0
        %429 = vmatpush2.msra.mxu0 0.0
        %430 = vmatprep.subr.mxu0 0.0
        %431 = vmatpush2.msra.mxu0 0.0
        %432 = vmatprep.subr.mxu0 0.0
        %433 = vmatpush2.msra.mxu0 0.0
        %434 = vmatprep.subr.mxu0 0.0
        %435 = vmatpush2.msra.mxu0 0.0
        %436 = vmatprep.subr.mxu0 0.0
        %437 = vmatpush2.msra.mxu0 0.0
        %438 = vmatprep.subr.mxu0 0.0
        %439 = vmatpush2.msra.mxu0 0.0
        %440 = vmatprep.subr.mxu0 0.0
        %441 = vmatpush2.msra.mxu0 0.0
        %442 = vmatprep.subr.mxu0 0.0
        %443 = vmatpush2.msra.mxu0 0.0
        %444 = vmatprep.subr.mxu0 0.0
        %445 = vmatpush2.msra.mxu0 0.0
        %446 = vmatprep.mubr.f32.mxu0 0.0
        %447 = vmatmul.mubr.f32.gmra.mxu0 %v359
        %v448 = vpop.f32.mrf.mxu0
        %v449 = vadd.f32 0.0, %v448
        %v450 = vpop.f32.mrf.mxu0
        %451 = vmatprep.mubr.f32.mxu0 0.0
        %452 = vmatmul.mubr.f32.gmra.mxu0 %v362
        %v453 = vpop.f32.mrf.mxu0
        %v454 = vadd.f32 0.0, %v453
        %v455 = vpop.f32.mrf.mxu0
        %456 = vmatprep.mubr.f32.mxu0 0.0
        %457 = vmatmul.mubr.f32.gmra.mxu0 %v365
        %v458 = vpop.f32.mrf.mxu0
        %v459 = vadd.f32 0.0, %v458
        %v460 = vpop.f32.mrf.mxu0
        %461 = vmatprep.mubr.f32.mxu0 0.0
        %462 = vmatmul.mubr.f32.gmra.mxu0 %v368
        %v463 = vpop.f32.mrf.mxu0
        %v464 = vadd.f32 0.0, %v463
        %v465 = vpop.f32.mrf.mxu0
        %466 = vmatprep.mubr.f32.mxu0 0.0
        %467 = vmatmul.mubr.f32.gmra.mxu0 %v371
        %v468 = vpop.f32.mrf.mxu0
        %v469 = vadd.f32 0.0, %v468
        %v470 = vpop.f32.mrf.mxu0
        %471 = vmatprep.mubr.f32.mxu0 0.0
        %472 = vmatmul.mubr.f32.gmra.mxu0 %v374
        %v473 = vpop.f32.mrf.mxu0
        %v474 = vadd.f32 0.0, %v473
        %v475 = vpop.f32.mrf.mxu0
        %476 = vmatprep.mubr.f32.mxu0 0.0
        %477 = vmatmul.mubr.f32.gmra.mxu0 %v377
        %v478 = vpop.f32.mrf.mxu0
        %v479 = vadd.f32 0.0, %v478
        %v480 = vpop.f32.mrf.mxu0
        %481 = vmatprep.mubr.f32.mxu0 0.0
        %482 = vmatmul.mubr.f32.gmra.mxu0 %v380
        %v483 = vpop.f32.mrf.mxu0
        %v484 = vadd.f32 0.0, %v483
        %v485 = vpop.f32.mrf.mxu0
        %486 = vdwg.mxu0
        %v487 = vlaneseq
        %v488 = vshrl.u32 %v487, 7
        %v489 = vsub.s32 0, %v488
        %v490 = vrot.slane %v354, %v489
        %v491 = vmul.f32 %v449, %v490
        %v492 = vmul.f32 %v454, %v490
        %v493 = vmul.f32 %v459, %v490
        %v494 = vmul.f32 %v464, %v490
        %v495 = vmul.f32 %v469, %v490
        %v496 = vmul.f32 %v474, %v490
        %v497 = vmul.f32 %v479, %v490
        %v498 = vmul.f32 %v484, %v490
        %v499 = vlaneseq
        %v500 = vshrl.u32 %v499, 7
        %v501 = vsub.s32 1, %v500
        %v502 = vrot.slane %v354, %v501
        %v503 = vadd.f32 %v491, %v502
        %v504 = vadd.f32 %v492, %v502
        %v505 = vadd.f32 %v493, %v502
        %v506 = vadd.f32 %v494, %v502
        %v507 = vadd.f32 %v495, %v502
        %v508 = vadd.f32 %v496, %v502
        %v509 = vadd.f32 %v497, %v502
        %v510 = vadd.f32 %v498, %v502
        %v511 = vmax.f32 %v503, 0.0
        %v512 = vmax.f32 %v504, 0.0
        %v513 = vmax.f32 %v505, 0.0
        %v514 = vmax.f32 %v506, 0.0
        %v515 = vmax.f32 %v507, 0.0
        %v516 = vmax.f32 %v508, 0.0
        %v517 = vmax.f32 %v509, 0.0
        %v518 = vmax.f32 %v510, 0.0
        %vm519 = vcmask 31744
        %520 = vst.msk [vmem:[#allocation2] sm:$0xff] %vm519, 0.0
        %vm521 = vcmask 25600
        %522 = vst.msk [vmem:[#allocation2 + $0x8] sm:$0x3] %vm521, 0.0
        %523 = vst.msk [vmem:[#allocation2 + $0x10] sm:$0xff] %vm519, 0.0
        %524 = vst.msk [vmem:[#allocation2 + $0x18] sm:$0x3] %vm521, 0.0
        %525 = vst.msk [vmem:[#allocation2 + $0x20] sm:$0xff] %vm519, 0.0
        %526 = vst.msk [vmem:[#allocation2 + $0x28] sm:$0x3] %vm521, 0.0
        %527 = vst.msk [vmem:[#allocation2 + $0x30] sm:$0xff] %vm519, 0.0
        %528 = vst.msk [vmem:[#allocation2 + $0x38] sm:$0x3] %vm521, 0.0
        %529 = vst.msk [vmem:[#allocation2 + $0x40] sm:$0xff] %vm519, 0.0
        %530 = vst.msk [vmem:[#allocation2 + $0x48] sm:$0x3] %vm521, 0.0
        %531 = vst.msk [vmem:[#allocation2 + $0x50] sm:$0xff] %vm519, 0.0
        %532 = vst.msk [vmem:[#allocation2 + $0x58] sm:$0x3] %vm521, 0.0
        %533 = vst.msk [vmem:[#allocation2 + $0x60] sm:$0xff] %vm519, 0.0
        %534 = vst.msk [vmem:[#allocation2 + $0x68] sm:$0x3] %vm521, 0.0
        %535 = vst.msk [vmem:[#allocation2 + $0x70] sm:$0xff] %vm519, 0.0
        %536 = vst.msk [vmem:[#allocation2 + $0x78] sm:$0x3] %vm521, 0.0
        %537 = vst.msk [vmem:[#allocation2 + $0x80] sm:$0xff] %vm519, 0.0
        %538 = vst.msk [vmem:[#allocation2 + $0x88] sm:$0x3] %vm521, 0.0
        %539 = vst.msk [vmem:[#allocation2 + $0x90] sm:$0xff] %vm519, 0.0
        %540 = vst.msk [vmem:[#allocation2 + $0x98] sm:$0x3] %vm521, 0.0
        %s541 = scalar_lea.vmem [#allocation2], 16
        %542 = vst.msk [vmem:[%s541 + $0x1] sm:$0xff] %vm519, %v511
        %543 = vst.msk [vmem:[%s541 + $0x11] sm:$0xff] %vm519, %v512
        %544 = vst.msk [vmem:[%s541 + $0x21] sm:$0xff] %vm519, %v513
        %545 = vst.msk [vmem:[%s541 + $0x31] sm:$0xff] %vm519, %v514
        %546 = vst.msk [vmem:[%s541 + $0x41] sm:$0xff] %vm519, %v515
        %547 = vst.msk [vmem:[%s541 + $0x51] sm:$0xff] %vm519, %v516
        %548 = vst.msk [vmem:[%s541 + $0x61] sm:$0xff] %vm519, %v517
        %549 = vst.msk [vmem:[%s541 + $0x71] sm:$0xff] %vm519, %v518
        %v550 = vld [vmem:[#allocation2] sm:$0xff]
        %v551 = vld [vmem:[#allocation2 + $0x8] sm:$0x3]
        %v552 = vld [vmem:[#allocation2 + $0x10] sm:$0xff]
        %v553 = vld [vmem:[#allocation2 + $0x18] sm:$0x3]
        %v554 = vld [vmem:[#allocation2 + $0x20] sm:$0xff]
        %v555 = vld [vmem:[#allocation2 + $0x28] sm:$0x3]
        %v556 = vld [vmem:[#allocation2 + $0x30] sm:$0xff]
        %v557 = vld [vmem:[#allocation2 + $0x38] sm:$0x3]
        %v558 = vld [vmem:[#allocation2 + $0x40] sm:$0xff]
        %v559 = vld [vmem:[#allocation2 + $0x48] sm:$0x3]
        %v560 = vld [vmem:[#allocation2 + $0x50] sm:$0xff]
        %v561 = vld [vmem:[#allocation2 + $0x58] sm:$0x3]
        %v562 = vld [vmem:[#allocation2 + $0x60] sm:$0xff]
        %v563 = vld [vmem:[#allocation2 + $0x68] sm:$0x3]
        %v564 = vld [vmem:[#allocation2 + $0x70] sm:$0xff]
        %v565 = vld [vmem:[#allocation2 + $0x78] sm:$0x3]
        %v566 = vld [vmem:[#allocation2 + $0x80] sm:$0xff]
        %v567 = vld [vmem:[#allocation2 + $0x88] sm:$0x3]
        %v568 = vld [vmem:[#allocation2 + $0x90] sm:$0xff]
        %v569 = vld [vmem:[#allocation2 + $0x98] sm:$0x3]
        %vm586 = vcmask 1046528
        %v587 = vrot.slane %v550, 1
        %v588 = vrot.slane %v551, 1
        %v589 = vsel %vm586, %v587, %v588
        %v590 = vrot.slane %v552, 1
        %v591 = vrot.slane %v553, 1
        %v592 = vsel %vm586, %v590, %v591
        %v593 = vrot.slane %v554, 1
        %v594 = vrot.slane %v555, 1
        %v595 = vsel %vm586, %v593, %v594
        %v596 = vrot.slane %v556, 1
        %v597 = vrot.slane %v557, 1
        %v598 = vsel %vm586, %v596, %v597
        %v599 = vrot.slane %v558, 1
        %v600 = vrot.slane %v559, 1
        %v601 = vsel %vm586, %v599, %v600
        %v602 = vrot.slane %v560, 1
        %v603 = vrot.slane %v561, 1
        %v604 = vsel %vm586, %v602, %v603
        %v605 = vrot.slane %v562, 1
        %v606 = vrot.slane %v563, 1
        %v607 = vsel %vm586, %v605, %v606
        %v608 = vrot.slane %v564, 1
        %v609 = vrot.slane %v565, 1
        %v610 = vsel %vm586, %v608, %v609
        %611 = vrot.lane.b32.xlu0 %v589, 4
        %v612 = vpop.permute.xlu0 %611
        %613 = vrot.lane.b32.xlu0 %v592, 4
        %v614 = vpop.permute.xlu0 %613
        %615 = vrot.lane.b32.xlu0 %v595, 4
        %v616 = vpop.permute.xlu0 %615
        %617 = vrot.lane.b32.xlu0 %v598, 4
        %v618 = vpop.permute.xlu0 %617
        %619 = vrot.lane.b32.xlu0 %v601, 4
        %v620 = vpop.permute.xlu0 %619
        %621 = vrot.lane.b32.xlu0 %v604, 4
        %v622 = vpop.permute.xlu0 %621
        %623 = vrot.lane.b32.xlu0 %v607, 4
        %v624 = vpop.permute.xlu0 %623
        %625 = vrot.lane.b32.xlu0 %v610, 4
        %v626 = vpop.permute.xlu0 %625
        %vm635 = vcmask 1045504
        %v636 = vrot.slane %v550, 2
        %v637 = vrot.slane %v551, 2
        %v638 = vsel %vm635, %v636, %v637
        %v639 = vrot.slane %v552, 2
        %v640 = vrot.slane %v553, 2
        %v641 = vsel %vm635, %v639, %v640
        %v642 = vrot.slane %v554, 2
        %v643 = vrot.slane %v555, 2
        %v644 = vsel %vm635, %v642, %v643
        %v645 = vrot.slane %v556, 2
        %v646 = vrot.slane %v557, 2
        %v647 = vsel %vm635, %v645, %v646
        %v648 = vrot.slane %v558, 2
        %v649 = vrot.slane %v559, 2
        %v650 = vsel %vm635, %v648, %v649
        %v651 = vrot.slane %v560, 2
        %v652 = vrot.slane %v561, 2
        %v653 = vsel %vm635, %v651, %v652
        %v654 = vrot.slane %v562, 2
        %v655 = vrot.slane %v563, 2
        %v656 = vsel %vm635, %v654, %v655
        %v657 = vrot.slane %v564, 2
        %v658 = vrot.slane %v565, 2
        %v659 = vsel %vm635, %v657, %v658
        %660 = vrot.lane.b32.xlu0 %v638, 8
        %v661 = vpop.permute.xlu0 %660
        %662 = vrot.lane.b32.xlu0 %v641, 8
        %v663 = vpop.permute.xlu0 %662
        %664 = vrot.lane.b32.xlu0 %v644, 8
        %v665 = vpop.permute.xlu0 %664
        %666 = vrot.lane.b32.xlu0 %v647, 8
        %v667 = vpop.permute.xlu0 %666
        %668 = vrot.lane.b32.xlu0 %v650, 8
        %v669 = vpop.permute.xlu0 %668
        %670 = vrot.lane.b32.xlu0 %v653, 8
        %v671 = vpop.permute.xlu0 %670
        %672 = vrot.lane.b32.xlu0 %v656, 8
        %v673 = vpop.permute.xlu0 %672
        %674 = vrot.lane.b32.xlu0 %v659, 8
        %v675 = vpop.permute.xlu0 %674
        %685 = vrot.lane.b32.xlu0 %v552, 12
        %v686 = vpop.permute.xlu0 %685
        %687 = vrot.lane.b32.xlu0 %v554, 12
        %v688 = vpop.permute.xlu0 %687
        %689 = vrot.lane.b32.xlu0 %v556, 12
        %v690 = vpop.permute.xlu0 %689
        %691 = vrot.lane.b32.xlu0 %v558, 12
        %v692 = vpop.permute.xlu0 %691
        %693 = vrot.lane.b32.xlu0 %v560, 12
        %v694 = vpop.permute.xlu0 %693
        %695 = vrot.lane.b32.xlu0 %v562, 12
        %v696 = vpop.permute.xlu0 %695
        %697 = vrot.lane.b32.xlu0 %v564, 12
        %v698 = vpop.permute.xlu0 %697
        %699 = vrot.lane.b32.xlu0 %v566, 12
        %v700 = vpop.permute.xlu0 %699
        %v710 = vrot.slane %v566, 1
        %v711 = vrot.slane %v567, 1
        %v712 = vsel %vm586, %v710, %v711
        %713 = vrot.lane.b32.xlu0 %v592, 16
        %v714 = vpop.permute.xlu0 %713
        %715 = vrot.lane.b32.xlu0 %v595, 16
        %v716 = vpop.permute.xlu0 %715
        %717 = vrot.lane.b32.xlu0 %v598, 16
        %v718 = vpop.permute.xlu0 %717
        %719 = vrot.lane.b32.xlu0 %v601, 16
        %v720 = vpop.permute.xlu0 %719
        %721 = vrot.lane.b32.xlu0 %v604, 16
        %v722 = vpop.permute.xlu0 %721
        %723 = vrot.lane.b32.xlu0 %v607, 16
        %v724 = vpop.permute.xlu0 %723
        %725 = vrot.lane.b32.xlu0 %v610, 16
        %v726 = vpop.permute.xlu0 %725
        %727 = vrot.lane.b32.xlu0 %v712, 16
        %v728 = vpop.permute.xlu0 %727
        %v737 = vrot.slane %v566, 2
        %v738 = vrot.slane %v567, 2
        %v739 = vsel %vm635, %v737, %v738
        %740 = vrot.lane.b32.xlu0 %v641, 20
        %v741 = vpop.permute.xlu0 %740
        %742 = vrot.lane.b32.xlu0 %v644, 20
        %v743 = vpop.permute.xlu0 %742
        %744 = vrot.lane.b32.xlu0 %v647, 20
        %v745 = vpop.permute.xlu0 %744
        %746 = vrot.lane.b32.xlu0 %v650, 20
        %v747 = vpop.permute.xlu0 %746
        %748 = vrot.lane.b32.xlu0 %v653, 20
        %v749 = vpop.permute.xlu0 %748
        %750 = vrot.lane.b32.xlu0 %v656, 20
        %v751 = vpop.permute.xlu0 %750
        %752 = vrot.lane.b32.xlu0 %v659, 20
        %v753 = vpop.permute.xlu0 %752
        %754 = vrot.lane.b32.xlu0 %v739, 20
        %v755 = vpop.permute.xlu0 %754
        %765 = vrot.lane.b32.xlu0 %v554, 24
        %v766 = vpop.permute.xlu0 %765
        %767 = vrot.lane.b32.xlu0 %v556, 24
        %v768 = vpop.permute.xlu0 %767
        %769 = vrot.lane.b32.xlu0 %v558, 24
        %v770 = vpop.permute.xlu0 %769
        %771 = vrot.lane.b32.xlu0 %v560, 24
        %v772 = vpop.permute.xlu0 %771
        %773 = vrot.lane.b32.xlu0 %v562, 24
        %v774 = vpop.permute.xlu0 %773
        %775 = vrot.lane.b32.xlu0 %v564, 24
        %v776 = vpop.permute.xlu0 %775
        %777 = vrot.lane.b32.xlu0 %v566, 24
        %v778 = vpop.permute.xlu0 %777
        %779 = vrot.lane.b32.xlu0 %v568, 24
        %v780 = vpop.permute.xlu0 %779
        %v790 = vrot.slane %v568, 1
        %v791 = vrot.slane %v569, 1
        %v792 = vsel %vm586, %v790, %v791
        %793 = vrot.lane.b32.xlu0 %v595, 28
        %v794 = vpop.permute.xlu0 %793
        %795 = vrot.lane.b32.xlu0 %v598, 28
        %v796 = vpop.permute.xlu0 %795
        %797 = vrot.lane.b32.xlu0 %v601, 28
        %v798 = vpop.permute.xlu0 %797
        %799 = vrot.lane.b32.xlu0 %v604, 28
        %v800 = vpop.permute.xlu0 %799
        %801 = vrot.lane.b32.xlu0 %v607, 28
        %v802 = vpop.permute.xlu0 %801
        %803 = vrot.lane.b32.xlu0 %v610, 28
        %v804 = vpop.permute.xlu0 %803
        %805 = vrot.lane.b32.xlu0 %v712, 28
        %v806 = vpop.permute.xlu0 %805
        %807 = vrot.lane.b32.xlu0 %v792, 28
        %v808 = vpop.permute.xlu0 %807
        %v817 = vrot.slane %v568, 2
        %v818 = vrot.slane %v569, 2
        %v819 = vsel %vm635, %v817, %v818
        %820 = vrot.lane.b32.xlu0 %v644, 32
        %v821 = vpop.permute.xlu0 %820
        %822 = vrot.lane.b32.xlu0 %v647, 32
        %v823 = vpop.permute.xlu0 %822
        %824 = vrot.lane.b32.xlu0 %v650, 32
        %v825 = vpop.permute.xlu0 %824
        %826 = vrot.lane.b32.xlu0 %v653, 32
        %v827 = vpop.permute.xlu0 %826
        %828 = vrot.lane.b32.xlu0 %v656, 32
        %v829 = vpop.permute.xlu0 %828
        %830 = vrot.lane.b32.xlu0 %v659, 32
        %v831 = vpop.permute.xlu0 %830
        %832 = vrot.lane.b32.xlu0 %v739, 32
        %v833 = vpop.permute.xlu0 %832
        %834 = vrot.lane.b32.xlu0 %v819, 32
        %v835 = vpop.permute.xlu0 %834
        %v844 = vsel %vm519, %v550, %v612
        %v845 = vsel %vm519, %v552, %v614
        %v846 = vsel %vm519, %v554, %v616
        %v847 = vsel %vm519, %v556, %v618
        %v848 = vsel %vm519, %v558, %v620
        %v849 = vsel %vm519, %v560, %v622
        %v850 = vsel %vm519, %v562, %v624
        %v851 = vsel %vm519, %v564, %v626
        %v852 = vsel %vm345, %v844, %v661
        %v853 = vsel %vm345, %v845, %v663
        %v854 = vsel %vm345, %v846, %v665
        %v855 = vsel %vm345, %v847, %v667
        %v856 = vsel %vm345, %v848, %v669
        %v857 = vsel %vm345, %v849, %v671
        %v858 = vsel %vm345, %v850, %v673
        %v859 = vsel %vm345, %v851, %v675
        %vm860 = vcmask 97280
        %v861 = vsel %vm860, %v852, %v686
        %v862 = vsel %vm860, %v853, %v688
        %v863 = vsel %vm860, %v854, %v690
        %v864 = vsel %vm860, %v855, %v692
        %v865 = vsel %vm860, %v856, %v694
        %v866 = vsel %vm860, %v857, %v696
        %v867 = vsel %vm860, %v858, %v698
        %v868 = vsel %vm860, %v859, %v700
        %v869 = vsel %vm357, %v861, %v714
        %v870 = vsel %vm357, %v862, %v716
        %v871 = vsel %vm357, %v863, %v718
        %v872 = vsel %vm357, %v864, %v720
        %v873 = vsel %vm357, %v865, %v722
        %v874 = vsel %vm357, %v866, %v724
        %v875 = vsel %vm357, %v867, %v726
        %v876 = vsel %vm357, %v868, %v728
        %vm877 = vcmask 162816
        %v878 = vsel %vm877, %v869, %v741
        %v879 = vsel %vm877, %v870, %v743
        %v880 = vsel %vm877, %v871, %v745
        %v881 = vsel %vm877, %v872, %v747
        %v882 = vsel %vm877, %v873, %v749
        %v883 = vsel %vm877, %v874, %v751
        %v884 = vsel %vm877, %v875, %v753
        %v885 = vsel %vm877, %v876, %v755
        %vm886 = vcmask 195584
        %v887 = vsel %vm886, %v878, %v766
        %v888 = vsel %vm886, %v879, %v768
        %v889 = vsel %vm886, %v880, %v770
        %v890 = vsel %vm886, %v881, %v772
        %v891 = vsel %vm886, %v882, %v774
        %v892 = vsel %vm886, %v883, %v776
        %v893 = vsel %vm886, %v884, %v778
        %v894 = vsel %vm886, %v885, %v780
        %vm895 = vcmask 228352
        %v896 = vsel %vm895, %v887, %v794
        %v897 = vsel %vm895, %v888, %v796
        %v898 = vsel %vm895, %v889, %v798
        %v899 = vsel %vm895, %v890, %v800
        %v900 = vsel %vm895, %v891, %v802
        %v901 = vsel %vm895, %v892, %v804
        %v902 = vsel %vm895, %v893, %v806
        %v903 = vsel %vm895, %v894, %v808
        %vm904 = vcmask 261120
        %v905 = vsel %vm904, %v896, %v821
        %v906 = vsel %vm904, %v897, %v823
        %v907 = vsel %vm904, %v898, %v825
        %v908 = vsel %vm904, %v899, %v827
        %v909 = vsel %vm904, %v900, %v829
        %v910 = vsel %vm904, %v901, %v831
        %v911 = vsel %vm904, %v902, %v833
        %v912 = vsel %vm904, %v903, %v835
        %v913 = vld [vmem:[%s4] sm:$0x3]
        %v914 = vld [vmem:[%s3] sm:$0xff]
        %v915 = vld [vmem:[%s3 + $0x8] sm:$0xff]
        %v916 = vld [vmem:[%s3 + $0x10] sm:$0xff]
        %v917 = vld [vmem:[%s3 + $0x18] sm:$0xff]
        %v918 = vld [vmem:[%s3 + $0x20] sm:$0xf]
        %vm919 = vcmask 293888
        %v921 = vsel %vm919, %v905, 0
        %v924 = vsel %vm919, %v906, 0
        %v927 = vsel %vm919, %v907, 0
        %v930 = vsel %vm919, %v908, 0
        %v933 = vsel %vm919, %v909, 0
        %v936 = vsel %vm919, %v910, 0
        %v939 = vsel %vm919, %v911, 0
        %v942 = vsel %vm919, %v912, 0
        %vm944 = vcmask 1043456
        %v946 = vsel %vm944, %v918, 0
        %948 = vmatprep.subr.mxu0 0.0
        %949 = vmatpush1.msra.mxu0 0.0
        %950 = vmatprep.subr.mxu0 0.0
        %951 = vmatpush1.msra.mxu0 0.0
        %952 = vmatprep.subr.mxu0 0.0
        %953 = vmatpush1.msra.mxu0 0.0
        %954 = vmatprep.subr.mxu0 0.0
        %955 = vmatpush1.msra.mxu0 0.0
        %956 = vmatprep.subr.mxu0 0.0
        %957 = vmatpush1.msra.mxu0 0.0
        %958 = vmatprep.subr.mxu0 0.0
        %959 = vmatpush1.msra.mxu0 0.0
        %960 = vmatprep.subr.mxu0 0.0
        %961 = vmatpush1.msra.mxu0 0.0
        %962 = vmatprep.subr.mxu0 0.0
        %963 = vmatpush1.msra.mxu0 0.0
        %964 = vmatprep.subr.mxu0 0.0
        %965 = vmatpush1.msra.mxu0 0.0
        %966 = vmatprep.subr.mxu0 0.0
        %967 = vmatpush1.msra.mxu0 0.0
        %968 = vmatprep.subr.mxu0 0.0
        %969 = vmatpush1.msra.mxu0 0.0
        %970 = vmatprep.subr.mxu0 0.0
        %971 = vmatpush1.msra.mxu0 %v946
        %972 = vmatprep.subr.mxu0 0.0
        %973 = vmatpush1.msra.mxu0 %v917
        %974 = vmatprep.subr.mxu0 0.0
        %975 = vmatpush1.msra.mxu0 %v916
        %976 = vmatprep.subr.mxu0 0.0
        %977 = vmatpush1.msra.mxu0 %v915
        %978 = vmatprep.subr.mxu0 0.0
        %979 = vmatpush1.msra.mxu0 %v914
        %980 = vmatprep.subr.mxu0 0.0
        %981 = vmatpush2.msra.mxu0 0.0
        %982 = vmatprep.subr.mxu0 0.0
        %983 = vmatpush2.msra.mxu0 0.0
        %984 = vmatprep.subr.mxu0 0.0
        %985 = vmatpush2.msra.mxu0 0.0
        %986 = vmatprep.subr.mxu0 0.0
        %987 = vmatpush2.msra.mxu0 0.0
        %988 = vmatprep.subr.mxu0 0.0
        %989 = vmatpush2.msra.mxu0 0.0
        %990 = vmatprep.subr.mxu0 0.0
        %991 = vmatpush2.msra.mxu0 0.0
        %992 = vmatprep.subr.mxu0 0.0
        %993 = vmatpush2.msra.mxu0 0.0
        %994 = vmatprep.subr.mxu0 0.0
        %995 = vmatpush2.msra.mxu0 0.0
        %996 = vmatprep.subr.mxu0 0.0
        %997 = vmatpush2.msra.mxu0 0.0
        %998 = vmatprep.subr.mxu0 0.0
        %999 = vmatpush2.msra.mxu0 0.0
        %1000 = vmatprep.subr.mxu0 0.0
        %1001 = vmatpush2.msra.mxu0 0.0
        %1002 = vmatprep.subr.mxu0 0.0
        %1003 = vmatpush2.msra.mxu0 0.0
        %1004 = vmatprep.subr.mxu0 0.0
        %1005 = vmatpush2.msra.mxu0 0.0
        %1006 = vmatprep.subr.mxu0 0.0
        %1007 = vmatpush2.msra.mxu0 0.0
        %1008 = vmatprep.subr.mxu0 0.0
        %1009 = vmatpush2.msra.mxu0 0.0
        %1010 = vmatprep.subr.mxu0 0.0
        %1011 = vmatpush2.msra.mxu0 0.0
        %1012 = vmatprep.mubr.f32.mxu0 0.0
        %1013 = vmatmul.mubr.f32.gmra.mxu0 %v921
        %v1014 = vpop.f32.mrf.mxu0
        %v1015 = vadd.f32 0.0, %v1014
        %v1016 = vpop.f32.mrf.mxu0
        %1017 = vmatprep.mubr.f32.mxu0 0.0
        %1018 = vmatmul.mubr.f32.gmra.mxu0 %v924
        %v1019 = vpop.f32.mrf.mxu0
        %v1020 = vadd.f32 0.0, %v1019
        %v1021 = vpop.f32.mrf.mxu0
        %1022 = vmatprep.mubr.f32.mxu0 0.0
        %1023 = vmatmul.mubr.f32.gmra.mxu0 %v927
        %v1024 = vpop.f32.mrf.mxu0
        %v1025 = vadd.f32 0.0, %v1024
        %v1026 = vpop.f32.mrf.mxu0
        %1027 = vmatprep.mubr.f32.mxu0 0.0
        %1028 = vmatmul.mubr.f32.gmra.mxu0 %v930
        %v1029 = vpop.f32.mrf.mxu0
        %v1030 = vadd.f32 0.0, %v1029
        %v1031 = vpop.f32.mrf.mxu0
        %1032 = vmatprep.mubr.f32.mxu0 0.0
        %1033 = vmatmul.mubr.f32.gmra.mxu0 %v933
        %v1034 = vpop.f32.mrf.mxu0
        %v1035 = vadd.f32 0.0, %v1034
        %v1036 = vpop.f32.mrf.mxu0
        %1037 = vmatprep.mubr.f32.mxu0 0.0
        %1038 = vmatmul.mubr.f32.gmra.mxu0 %v936
        %v1039 = vpop.f32.mrf.mxu0
        %v1040 = vadd.f32 0.0, %v1039
        %v1041 = vpop.f32.mrf.mxu0
        %1042 = vmatprep.mubr.f32.mxu0 0.0
        %1043 = vmatmul.mubr.f32.gmra.mxu0 %v939
        %v1044 = vpop.f32.mrf.mxu0
        %v1045 = vadd.f32 0.0, %v1044
        %v1046 = vpop.f32.mrf.mxu0
        %1047 = vmatprep.mubr.f32.mxu0 0.0
        %1048 = vmatmul.mubr.f32.gmra.mxu0 %v942
        %v1049 = vpop.f32.mrf.mxu0
        %v1050 = vadd.f32 0.0, %v1049
        %v1051 = vpop.f32.mrf.mxu0
        %1052 = vdwg.mxu0
        %v1053 = vlaneseq
        %v1054 = vshrl.u32 %v1053, 7
        %v1055 = vsub.s32 0, %v1054
        %v1056 = vrot.slane %v913, %v1055
        %v1057 = vmul.f32 %v1015, %v1056
        %v1058 = vmul.f32 %v1020, %v1056
        %v1059 = vmul.f32 %v1025, %v1056
        %v1060 = vmul.f32 %v1030, %v1056
        %v1061 = vmul.f32 %v1035, %v1056
        %v1062 = vmul.f32 %v1040, %v1056
        %v1063 = vmul.f32 %v1045, %v1056
        %v1064 = vmul.f32 %v1050, %v1056
        %v1065 = vlaneseq
        %v1066 = vshrl.u32 %v1065, 7
        %v1067 = vsub.s32 1, %v1066
        %v1068 = vrot.slane %v913, %v1067
        %v1069 = vadd.f32 %v1057, %v1068
        %v1070 = vadd.f32 %v1058, %v1068
        %v1071 = vadd.f32 %v1059, %v1068
        %v1072 = vadd.f32 %v1060, %v1068
        %v1073 = vadd.f32 %v1061, %v1068
        %v1074 = vadd.f32 %v1062, %v1068
        %v1075 = vadd.f32 %v1063, %v1068
        %v1076 = vadd.f32 %v1064, %v1068
        %v1077 = vmax.f32 %v1069, 0.0
        %v1078 = vmax.f32 %v1070, 0.0
        %v1079 = vmax.f32 %v1071, 0.0
        %v1080 = vmax.f32 %v1072, 0.0
        %v1081 = vmax.f32 %v1073, 0.0
        %v1082 = vmax.f32 %v1074, 0.0
        %v1083 = vmax.f32 %v1075, 0.0
        %v1084 = vmax.f32 %v1076, 0.0
        %1085 = vst.msk [vmem:[#allocation3] sm:$0xff] %vm345, 0.0
        %vm1086 = vcmask 58368
        %1087 = vst.msk [vmem:[#allocation3 + $0x8] sm:$0x3] %vm1086, 0.0
        %1088 = vst.msk [vmem:[#allocation3 + $0x10] sm:$0xff] %vm345, 0.0
        %1089 = vst.msk [vmem:[#allocation3 + $0x18] sm:$0x3] %vm1086, 0.0
        %1090 = vst.msk [vmem:[#allocation3 + $0x20] sm:$0xff] %vm345, 0.0
        %1091 = vst.msk [vmem:[#allocation3 + $0x28] sm:$0x3] %vm1086, 0.0
        %1092 = vst.msk [vmem:[#allocation3 + $0x30] sm:$0xff] %vm345, 0.0
        %1093 = vst.msk [vmem:[#allocation3 + $0x38] sm:$0x3] %vm1086, 0.0
        %1094 = vst.msk [vmem:[#allocation3 + $0x40] sm:$0xff] %vm345, 0.0
        %1095 = vst.msk [vmem:[#allocation3 + $0x48] sm:$0x3] %vm1086, 0.0
        %1096 = vst.msk [vmem:[#allocation3 + $0x50] sm:$0xff] %vm345, 0.0
        %1097 = vst.msk [vmem:[#allocation3 + $0x58] sm:$0x3] %vm1086, 0.0
        %1098 = vst.msk [vmem:[#allocation3 + $0x60] sm:$0xff] %vm345, 0.0
        %1099 = vst.msk [vmem:[#allocation3 + $0x68] sm:$0x3] %vm1086, 0.0
        %1100 = vst.msk [vmem:[#allocation3 + $0x70] sm:$0xff] %vm345, 0.0
        %1101 = vst.msk [vmem:[#allocation3 + $0x78] sm:$0x3] %vm1086, 0.0
        %1102 = vst.msk [vmem:[#allocation3 + $0x80] sm:$0xff] %vm345, 0.0
        %1103 = vst.msk [vmem:[#allocation3 + $0x88] sm:$0x3] %vm1086, 0.0
        %1104 = vst.msk [vmem:[#allocation3 + $0x90] sm:$0xff] %vm345, 0.0
        %1105 = vst.msk [vmem:[#allocation3 + $0x98] sm:$0x3] %vm1086, 0.0
        %s1106 = scalar_lea.vmem [#allocation3], 16
        %1107 = vst.msk [vmem:[%s1106 + $0x1] sm:$0xff] %vm345, %v1077
        %1108 = vst.msk [vmem:[%s1106 + $0x11] sm:$0xff] %vm345, %v1078
        %1109 = vst.msk [vmem:[%s1106 + $0x21] sm:$0xff] %vm345, %v1079
        %1110 = vst.msk [vmem:[%s1106 + $0x31] sm:$0xff] %vm345, %v1080
        %1111 = vst.msk [vmem:[%s1106 + $0x41] sm:$0xff] %vm345, %v1081
        %1112 = vst.msk [vmem:[%s1106 + $0x51] sm:$0xff] %vm345, %v1082
        %1113 = vst.msk [vmem:[%s1106 + $0x61] sm:$0xff] %vm345, %v1083
        %1114 = vst.msk [vmem:[%s1106 + $0x71] sm:$0xff] %vm345, %v1084
        %v1115 = vld [vmem:[#allocation3] sm:$0xff]
        %v1116 = vld [vmem:[#allocation3 + $0x8] sm:$0x3]
        %v1117 = vld [vmem:[#allocation3 + $0x10] sm:$0xff]
        %v1118 = vld [vmem:[#allocation3 + $0x18] sm:$0x3]
        %v1119 = vld [vmem:[#allocation3 + $0x20] sm:$0xff]
        %v1120 = vld [vmem:[#allocation3 + $0x28] sm:$0x3]
        %v1121 = vld [vmem:[#allocation3 + $0x30] sm:$0xff]
        %v1122 = vld [vmem:[#allocation3 + $0x38] sm:$0x3]
        %v1123 = vld [vmem:[#allocation3 + $0x40] sm:$0xff]
        %v1124 = vld [vmem:[#allocation3 + $0x48] sm:$0x3]
        %v1125 = vld [vmem:[#allocation3 + $0x50] sm:$0xff]
        %v1126 = vld [vmem:[#allocation3 + $0x58] sm:$0x3]
        %v1127 = vld [vmem:[#allocation3 + $0x60] sm:$0xff]
        %v1128 = vld [vmem:[#allocation3 + $0x68] sm:$0x3]
        %v1129 = vld [vmem:[#allocation3 + $0x70] sm:$0xff]
        %v1130 = vld [vmem:[#allocation3 + $0x78] sm:$0x3]
        %v1131 = vld [vmem:[#allocation3 + $0x80] sm:$0xff]
        %v1132 = vld [vmem:[#allocation3 + $0x88] sm:$0x3]
        %v1133 = vld [vmem:[#allocation3 + $0x90] sm:$0xff]
        %v1134 = vld [vmem:[#allocation3 + $0x98] sm:$0x3]
        %v1151 = vrot.slane %v1115, 1
        %v1152 = vrot.slane %v1116, 1
        %v1153 = vsel %vm586, %v1151, %v1152
        %v1154 = vrot.slane %v1117, 1
        %v1155 = vrot.slane %v1118, 1
        %v1156 = vsel %vm586, %v1154, %v1155
        %v1157 = vrot.slane %v1119, 1
        %v1158 = vrot.slane %v1120, 1
        %v1159 = vsel %vm586, %v1157, %v1158
        %v1160 = vrot.slane %v1121, 1
        %v1161 = vrot.slane %v1122, 1
        %v1162 = vsel %vm586, %v1160, %v1161
        %v1163 = vrot.slane %v1123, 1
        %v1164 = vrot.slane %v1124, 1
        %v1165 = vsel %vm586, %v1163, %v1164
        %v1166 = vrot.slane %v1125, 1
        %v1167 = vrot.slane %v1126, 1
        %v1168 = vsel %vm586, %v1166, %v1167
        %v1169 = vrot.slane %v1127, 1
        %v1170 = vrot.slane %v1128, 1
        %v1171 = vsel %vm586, %v1169, %v1170
        %v1172 = vrot.slane %v1129, 1
        %v1173 = vrot.slane %v1130, 1
        %v1174 = vsel %vm586, %v1172, %v1173
        %1175 = vrot.lane.b32.xlu0 %v1153, 8
        %v1176 = vpop.permute.xlu0 %1175
        %1177 = vrot.lane.b32.xlu0 %v1156, 8
        %v1178 = vpop.permute.xlu0 %1177
        %1179 = vrot.lane.b32.xlu0 %v1159, 8
        %v1180 = vpop.permute.xlu0 %1179
        %1181 = vrot.lane.b32.xlu0 %v1162, 8
        %v1182 = vpop.permute.xlu0 %1181
        %1183 = vrot.lane.b32.xlu0 %v1165, 8
        %v1184 = vpop.permute.xlu0 %1183
        %1185 = vrot.lane.b32.xlu0 %v1168, 8
        %v1186 = vpop.permute.xlu0 %1185
        %1187 = vrot.lane.b32.xlu0 %v1171, 8
        %v1188 = vpop.permute.xlu0 %1187
        %1189 = vrot.lane.b32.xlu0 %v1174, 8
        %v1190 = vpop.permute.xlu0 %1189
        %v1199 = vrot.slane %v1115, 2
        %v1200 = vrot.slane %v1116, 2
        %v1201 = vsel %vm635, %v1199, %v1200
        %v1202 = vrot.slane %v1117, 2
        %v1203 = vrot.slane %v1118, 2
        %v1204 = vsel %vm635, %v1202, %v1203
        %v1205 = vrot.slane %v1119, 2
        %v1206 = vrot.slane %v1120, 2
        %v1207 = vsel %vm635, %v1205, %v1206
        %v1208 = vrot.slane %v1121, 2
        %v1209 = vrot.slane %v1122, 2
        %v1210 = vsel %vm635, %v1208, %v1209
        %v1211 = vrot.slane %v1123, 2
        %v1212 = vrot.slane %v1124, 2
        %v1213 = vsel %vm635, %v1211, %v1212
        %v1214 = vrot.slane %v1125, 2
        %v1215 = vrot.slane %v1126, 2
        %v1216 = vsel %vm635, %v1214, %v1215
        %v1217 = vrot.slane %v1127, 2
        %v1218 = vrot.slane %v1128, 2
        %v1219 = vsel %vm635, %v1217, %v1218
        %v1220 = vrot.slane %v1129, 2
        %v1221 = vrot.slane %v1130, 2
        %v1222 = vsel %vm635, %v1220, %v1221
        %1223 = vrot.lane.b32.xlu0 %v1201, 16
        %v1224 = vpop.permute.xlu0 %1223
        %1225 = vrot.lane.b32.xlu0 %v1204, 16
        %v1226 = vpop.permute.xlu0 %1225
        %1227 = vrot.lane.b32.xlu0 %v1207, 16
        %v1228 = vpop.permute.xlu0 %1227
        %1229 = vrot.lane.b32.xlu0 %v1210, 16
        %v1230 = vpop.permute.xlu0 %1229
        %1231 = vrot.lane.b32.xlu0 %v1213, 16
        %v1232 = vpop.permute.xlu0 %1231
        %1233 = vrot.lane.b32.xlu0 %v1216, 16
        %v1234 = vpop.permute.xlu0 %1233
        %1235 = vrot.lane.b32.xlu0 %v1219, 16
        %v1236 = vpop.permute.xlu0 %1235
        %1237 = vrot.lane.b32.xlu0 %v1222, 16
        %v1238 = vpop.permute.xlu0 %1237
        %1248 = vrot.lane.b32.xlu0 %v1117, 24
        %v1249 = vpop.permute.xlu0 %1248
        %1250 = vrot.lane.b32.xlu0 %v1119, 24
        %v1251 = vpop.permute.xlu0 %1250
        %1252 = vrot.lane.b32.xlu0 %v1121, 24
        %v1253 = vpop.permute.xlu0 %1252
        %1254 = vrot.lane.b32.xlu0 %v1123, 24
        %v1255 = vpop.permute.xlu0 %1254
        %1256 = vrot.lane.b32.xlu0 %v1125, 24
        %v1257 = vpop.permute.xlu0 %1256
        %1258 = vrot.lane.b32.xlu0 %v1127, 24
        %v1259 = vpop.permute.xlu0 %1258
        %1260 = vrot.lane.b32.xlu0 %v1129, 24
        %v1261 = vpop.permute.xlu0 %1260
        %1262 = vrot.lane.b32.xlu0 %v1131, 24
        %v1263 = vpop.permute.xlu0 %1262
        %v1273 = vrot.slane %v1131, 1
        %v1274 = vrot.slane %v1132, 1
        %v1275 = vsel %vm586, %v1273, %v1274
        %1276 = vrot.lane.b32.xlu0 %v1156, 32
        %v1277 = vpop.permute.xlu0 %1276
        %1278 = vrot.lane.b32.xlu0 %v1159, 32
        %v1279 = vpop.permute.xlu0 %1278
        %1280 = vrot.lane.b32.xlu0 %v1162, 32
        %v1281 = vpop.permute.xlu0 %1280
        %1282 = vrot.lane.b32.xlu0 %v1165, 32
        %v1283 = vpop.permute.xlu0 %1282
        %1284 = vrot.lane.b32.xlu0 %v1168, 32
        %v1285 = vpop.permute.xlu0 %1284
        %1286 = vrot.lane.b32.xlu0 %v1171, 32
        %v1287 = vpop.permute.xlu0 %1286
        %1288 = vrot.lane.b32.xlu0 %v1174, 32
        %v1289 = vpop.permute.xlu0 %1288
        %1290 = vrot.lane.b32.xlu0 %v1275, 32
        %v1291 = vpop.permute.xlu0 %1290
        %v1300 = vrot.slane %v1131, 2
        %v1301 = vrot.slane %v1132, 2
        %v1302 = vsel %vm635, %v1300, %v1301
        %1303 = vrot.lane.b32.xlu0 %v1204, 40
        %v1304 = vpop.permute.xlu0 %1303
        %1305 = vrot.lane.b32.xlu0 %v1207, 40
        %v1306 = vpop.permute.xlu0 %1305
        %1307 = vrot.lane.b32.xlu0 %v1210, 40
        %v1308 = vpop.permute.xlu0 %1307
        %1309 = vrot.lane.b32.xlu0 %v1213, 40
        %v1310 = vpop.permute.xlu0 %1309
        %1311 = vrot.lane.b32.xlu0 %v1216, 40
        %v1312 = vpop.permute.xlu0 %1311
        %1313 = vrot.lane.b32.xlu0 %v1219, 40
        %v1314 = vpop.permute.xlu0 %1313
        %1315 = vrot.lane.b32.xlu0 %v1222, 40
        %v1316 = vpop.permute.xlu0 %1315
        %1317 = vrot.lane.b32.xlu0 %v1302, 40
        %v1318 = vpop.permute.xlu0 %1317
        %1328 = vrot.lane.b32.xlu0 %v1119, 48
        %v1329 = vpop.permute.xlu0 %1328
        %1330 = vrot.lane.b32.xlu0 %v1121, 48
        %v1331 = vpop.permute.xlu0 %1330
        %1332 = vrot.lane.b32.xlu0 %v1123, 48
        %v1333 = vpop.permute.xlu0 %1332
        %1334 = vrot.lane.b32.xlu0 %v1125, 48
        %v1335 = vpop.permute.xlu0 %1334
        %1336 = vrot.lane.b32.xlu0 %v1127, 48
        %v1337 = vpop.permute.xlu0 %1336
        %1338 = vrot.lane.b32.xlu0 %v1129, 48
        %v1339 = vpop.permute.xlu0 %1338
        %1340 = vrot.lane.b32.xlu0 %v1131, 48
        %v1341 = vpop.permute.xlu0 %1340
        %1342 = vrot.lane.b32.xlu0 %v1133, 48
        %v1343 = vpop.permute.xlu0 %1342
        %v1353 = vrot.slane %v1133, 1
        %v1354 = vrot.slane %v1134, 1
        %v1355 = vsel %vm586, %v1353, %v1354
        %1356 = vrot.lane.b32.xlu0 %v1159, 56
        %v1357 = vpop.permute.xlu0 %1356
        %1358 = vrot.lane.b32.xlu0 %v1162, 56
        %v1359 = vpop.permute.xlu0 %1358
        %1360 = vrot.lane.b32.xlu0 %v1165, 56
        %v1361 = vpop.permute.xlu0 %1360
        %1362 = vrot.lane.b32.xlu0 %v1168, 56
        %v1363 = vpop.permute.xlu0 %1362
        %1364 = vrot.lane.b32.xlu0 %v1171, 56
        %v1365 = vpop.permute.xlu0 %1364
        %1366 = vrot.lane.b32.xlu0 %v1174, 56
        %v1367 = vpop.permute.xlu0 %1366
        %1368 = vrot.lane.b32.xlu0 %v1275, 56
        %v1369 = vpop.permute.xlu0 %1368
        %1370 = vrot.lane.b32.xlu0 %v1355, 56
        %v1371 = vpop.permute.xlu0 %1370
        %v1380 = vrot.slane %v1133, 2
        %v1381 = vrot.slane %v1134, 2
        %v1382 = vsel %vm635, %v1380, %v1381
        %1383 = vrot.lane.b32.xlu0 %v1207, 64
        %v1384 = vpop.permute.xlu0 %1383
        %1385 = vrot.lane.b32.xlu0 %v1210, 64
        %v1386 = vpop.permute.xlu0 %1385
        %1387 = vrot.lane.b32.xlu0 %v1213, 64
        %v1388 = vpop.permute.xlu0 %1387
        %1389 = vrot.lane.b32.xlu0 %v1216, 64
        %v1390 = vpop.permute.xlu0 %1389
        %1391 = vrot.lane.b32.xlu0 %v1219, 64
        %v1392 = vpop.permute.xlu0 %1391
        %1393 = vrot.lane.b32.xlu0 %v1222, 64
        %v1394 = vpop.permute.xlu0 %1393
        %1395 = vrot.lane.b32.xlu0 %v1302, 64
        %v1396 = vpop.permute.xlu0 %1395
        %1397 = vrot.lane.b32.xlu0 %v1382, 64
        %v1398 = vpop.permute.xlu0 %1397
        %v1407 = vsel %vm345, %v1115, %v1176
        %v1408 = vsel %vm345, %v1117, %v1178
        %v1409 = vsel %vm345, %v1119, %v1180
        %v1410 = vsel %vm345, %v1121, %v1182
        %v1411 = vsel %vm345, %v1123, %v1184
        %v1412 = vsel %vm345, %v1125, %v1186
        %v1413 = vsel %vm345, %v1127, %v1188
        %v1414 = vsel %vm345, %v1129, %v1190
        %v1415 = vsel %vm357, %v1407, %v1224
        %v1416 = vsel %vm357, %v1408, %v1226
        %v1417 = vsel %vm357, %v1409, %v1228
        %v1418 = vsel %vm357, %v1410, %v1230
        %v1419 = vsel %vm357, %v1411, %v1232
        %v1420 = vsel %vm357, %v1412, %v1234
        %v1421 = vsel %vm357, %v1413, %v1236
        %v1422 = vsel %vm357, %v1414, %v1238
        %v1423 = vsel %vm886, %v1415, %v1249
        %v1424 = vsel %vm886, %v1416, %v1251
        %v1425 = vsel %vm886, %v1417, %v1253
        %v1426 = vsel %vm886, %v1418, %v1255
        %v1427 = vsel %vm886, %v1419, %v1257
        %v1428 = vsel %vm886, %v1420, %v1259
        %v1429 = vsel %vm886, %v1421, %v1261
        %v1430 = vsel %vm886, %v1422, %v1263
        %v1431 = vsel %vm904, %v1423, %v1277
        %v1432 = vsel %vm904, %v1424, %v1279
        %v1433 = vsel %vm904, %v1425, %v1281
        %v1434 = vsel %vm904, %v1426, %v1283
        %v1435 = vsel %vm904, %v1427, %v1285
        %v1436 = vsel %vm904, %v1428, %v1287
        %v1437 = vsel %vm904, %v1429, %v1289
        %v1438 = vsel %vm904, %v1430, %v1291
        %vm1439 = vcmask 326656
        %v1440 = vsel %vm1439, %v1431, %v1304
        %v1441 = vsel %vm1439, %v1432, %v1306
        %v1442 = vsel %vm1439, %v1433, %v1308
        %v1443 = vsel %vm1439, %v1434, %v1310
        %v1444 = vsel %vm1439, %v1435, %v1312
        %v1445 = vsel %vm1439, %v1436, %v1314
        %v1446 = vsel %vm1439, %v1437, %v1316
        %v1447 = vsel %vm1439, %v1438, %v1318
        %vm1448 = vcmask 392192
        %v1449 = vsel %vm1448, %v1440, %v1329
        %v1450 = vsel %vm1448, %v1441, %v1331
        %v1451 = vsel %vm1448, %v1442, %v1333
        %v1452 = vsel %vm1448, %v1443, %v1335
        %v1453 = vsel %vm1448, %v1444, %v1337
        %v1454 = vsel %vm1448, %v1445, %v1339
        %v1455 = vsel %vm1448, %v1446, %v1341
        %v1456 = vsel %vm1448, %v1447, %v1343
        %vm1457 = vcmask 457728
        %v1458 = vsel %vm1457, %v1449, %v1357
        %v1459 = vsel %vm1457, %v1450, %v1359
        %v1460 = vsel %vm1457, %v1451, %v1361
        %v1461 = vsel %vm1457, %v1452, %v1363
        %v1462 = vsel %vm1457, %v1453, %v1365
        %v1463 = vsel %vm1457, %v1454, %v1367
        %v1464 = vsel %vm1457, %v1455, %v1369
        %v1465 = vsel %vm1457, %v1456, %v1371
        %vm1466 = vcmask 523264
        %v1467 = vsel %vm1466, %v1458, %v1384
        %v1468 = vsel %vm1466, %v1459, %v1386
        %v1469 = vsel %vm1466, %v1460, %v1388
        %v1470 = vsel %vm1466, %v1461, %v1390
        %v1471 = vsel %vm1466, %v1462, %v1392
        %v1472 = vsel %vm1466, %v1463, %v1394
        %v1473 = vsel %vm1466, %v1464, %v1396
        %v1474 = vsel %vm1466, %v1465, %v1398
        %v1475 = vld [vmem:[%s6] sm:$0xff]
        %v1476 = vld [vmem:[%s5] sm:$0xff]
        %vm1477 = vcmask 588800
        %v1479 = vsel %vm1477, %v1476, 0
        %v1482 = vsel %vm1477, %v1467, 0
        %v1485 = vsel %vm1477, %v1468, 0
        %v1488 = vsel %vm1477, %v1469, 0
        %v1491 = vsel %vm1477, %v1470, 0
        %v1494 = vsel %vm1477, %v1471, 0
        %v1497 = vsel %vm1477, %v1472, 0
        %v1500 = vsel %vm1477, %v1473, 0
        %v1503 = vsel %vm1477, %v1474, 0
        %1505 = vmatprep.subr.mxu0 0.0
        %1506 = vmatpush1.xpose.msra.mxu0 0.0
        %1507 = vmatprep.subr.mxu0 0.0
        %1508 = vmatpush1.xpose.msra.mxu0 0.0
        %1509 = vmatprep.subr.mxu0 0.0
        %1510 = vmatpush1.xpose.msra.mxu0 0.0
        %1511 = vmatprep.subr.mxu0 0.0
        %1512 = vmatpush1.xpose.msra.mxu0 0.0
        %1513 = vmatprep.subr.mxu0 0.0
        %1514 = vmatpush1.xpose.msra.mxu0 0.0
        %1515 = vmatprep.subr.mxu0 0.0
        %1516 = vmatpush1.xpose.msra.mxu0 0.0
        %1517 = vmatprep.subr.mxu0 0.0
        %1518 = vmatpush1.xpose.msra.mxu0 0.0
        %1519 = vmatprep.subr.mxu0 0.0
        %1520 = vmatpush1.xpose.msra.mxu0 0.0
        %1521 = vmatprep.subr.mxu0 0.0
        %1522 = vmatpush1.xpose.msra.mxu0 %v1503
        %1523 = vmatprep.subr.mxu0 0.0
        %1524 = vmatpush1.xpose.msra.mxu0 %v1500
        %1525 = vmatprep.subr.mxu0 0.0
        %1526 = vmatpush1.xpose.msra.mxu0 %v1497
        %1527 = vmatprep.subr.mxu0 0.0
        %1528 = vmatpush1.xpose.msra.mxu0 %v1494
        %1529 = vmatprep.subr.mxu0 0.0
        %1530 = vmatpush1.xpose.msra.mxu0 %v1491
        %1531 = vmatprep.subr.mxu0 0.0
        %1532 = vmatpush1.xpose.msra.mxu0 %v1488
        %1533 = vmatprep.subr.mxu0 0.0
        %1534 = vmatpush1.xpose.msra.mxu0 %v1485
        %1535 = vmatprep.subr.mxu0 0.0
        %1536 = vmatpush1.xpose.msra.mxu0 %v1482
        %1537 = vmatprep.subr.mxu0 0.0
        %1538 = vmatpush2.xpose.msra.mxu0 0.0
        %1539 = vmatprep.subr.mxu0 0.0
        %1540 = vmatpush2.xpose.msra.mxu0 0.0
        %1541 = vmatprep.subr.mxu0 0.0
        %1542 = vmatpush2.xpose.msra.mxu0 0.0
        %1543 = vmatprep.subr.mxu0 0.0
        %1544 = vmatpush2.xpose.msra.mxu0 0.0
        %1545 = vmatprep.subr.mxu0 0.0
        %1546 = vmatpush2.xpose.msra.mxu0 0.0
        %1547 = vmatprep.subr.mxu0 0.0
        %1548 = vmatpush2.xpose.msra.mxu0 0.0
        %1549 = vmatprep.subr.mxu0 0.0
        %1550 = vmatpush2.xpose.msra.mxu0 0.0
        %1551 = vmatprep.subr.mxu0 0.0
        %1552 = vmatpush2.xpose.msra.mxu0 0.0
        %1553 = vmatprep.subr.mxu0 0.0
        %1554 = vmatpush2.xpose.msra.mxu0 0.0
        %1555 = vmatprep.subr.mxu0 0.0
        %1556 = vmatpush2.xpose.msra.mxu0 0.0
        %1557 = vmatprep.subr.mxu0 0.0
        %1558 = vmatpush2.xpose.msra.mxu0 0.0
        %1559 = vmatprep.subr.mxu0 0.0
        %1560 = vmatpush2.xpose.msra.mxu0 0.0
        %1561 = vmatprep.subr.mxu0 0.0
        %1562 = vmatpush2.xpose.msra.mxu0 0.0
        %1563 = vmatprep.subr.mxu0 0.0
        %1564 = vmatpush2.xpose.msra.mxu0 0.0
        %1565 = vmatprep.subr.mxu0 0.0
        %1566 = vmatpush2.xpose.msra.mxu0 0.0
        %1567 = vmatprep.subr.mxu0 0.0
        %1568 = vmatpush2.xpose.msra.mxu0 0.0
        %1569 = vmatprep.mubr.f32.mxu0 0.0
        %1570 = vmatmul.mubr.f32.gmra.mxu0 %v1479
        %v1571 = vpop.f32.mrf.mxu0
        %v1572 = vadd.f32 0.0, %v1571
        %v1573 = vpop.f32.mrf.mxu0
        %1574 = vdwg.mxu0
        %1576 = vset.pattern.permute.xlu0 0
        %1577 = vperm.xlu0 %1576, %v1475
        %v1578 = vpop.permute.xlu0 %1577
        %v1580 = vmul.f32 %v1572, %v1578
        %1581 = vset.pattern.permute.xlu0 1
        %1582 = vperm.xlu0 %1581, %v1475
        %v1583 = vpop.permute.xlu0 %1582
        %v1585 = vadd.f32 %v1580, %v1583
        %v1586 = vmax.f32 %v1585, 0.0
        %1587 = vst.msk [vmem:[%s296] sm:$0xff] %vm1466, %v1586
        %s1588 = sand.u32 %s184, 1
        %s1589 = scalar_lea.sflag [#allocation6], %s1588
        %s1590 = sand.u32 %s184, 1
        %s1591 = smul.addr %s1590, 8
        %s1592 = scalar_lea.vmem [#allocation7], %s1591
        // Predicated region
        $region53: #{tpu_custom_call.1} parent=47 // pred_check
          %p1593 = pneg %p194
        $region54: #{tpu_custom_call.1} parent=47 // pred_check_branch
          %1595 = sbr.rel (%p1593) target = $region56
        $region55: #{tpu_custom_call.1} parent=47 // pred_region
          %s1597 = ssub.s32 128, 128
          %1598 = vsyncadd %s1589, %s1597
          %s1599 = smul.addr %s24, 128
          %s1600 = scalar_lea.hbm %s7, %s1599
          %s1602 = sshll.u32 %s1592, 4
          %s1603 = int_to_ptr.vmem [resolvable:$true] %s1602
          %1605 = dma.vmem_to_hbm [thread:$0]  %s1603, 128, %s1600, %s1589
        $region56: #{tpu_custom_call.1} parent=47 // pred_fallthru
          _
      $region48: #{tpu_custom_call.1} parent=5 // pred_fallthru
        _
      %p1606 = scmp.le.s32.totalorder 2, %s19
      // Predicated region
      $region57: #{tpu_custom_call.1} parent=5 // pred_check
        %p1607 = pneg %p1606
      $region58: #{tpu_custom_call.1} parent=5 // pred_check_branch
        %1609 = sbr.rel (%p1607) target = $region60
      $region59: #{tpu_custom_call.1} parent=5 // pred_region
        %s1610 = ssub.s32 %s19, 2
        // Predicated region
        $region61: #{tpu_custom_call.1} parent=59 // pred_check
          %p1611 = pneg %p200
        $region62: #{tpu_custom_call.1} parent=59 // pred_check_branch
          %1613 = sbr.rel (%p1611) target = $region64
        $region63: #{tpu_custom_call.1} parent=59 // pred_region
          %s1614 = sand.u32 %s185, 1
          %s1615 = scalar_lea.sflag [#allocation6], %s1614
          %s1616 = sand.u32 %s185, 1
          %s1617 = smul.addr %s1616, 8
          %s1618 = scalar_lea.vmem [#allocation7], %s1617
          %1619 = dma.done %s1615, 128
        $region64: #{tpu_custom_call.1} parent=59 // pred_fallthru
          _
      $region60: #{tpu_custom_call.1} parent=5 // pred_fallthru
        _
    $region6: #{tpu_custom_call.1} parent=1 // loop_footer
      %s23 = sadd.s32 1, %s19
    $region7: #{tpu_custom_call.1} parent=1 // loop_footer_branch
      %18 = sbr.rel target = $region3
    $region8: #{tpu_custom_call.1} parent=1 // loop_exit
      _
    %1620 = vsyncpa [#allocation5], 1
    %s1621 = scalar_lea.sflag [#allocation5], 1
    %1622 = vsyncpa %s1621, 1
    %1623 = vsyncpa [#allocation6], 1
    %s1624 = scalar_lea.sflag [#allocation6], 1
    %1625 = vsyncpa %s1624, 1

</llo_original>
